<compile_context>
chip_gen: v7x
topology: tpu7x:2x2x1
jax: 0.10.0
libtpu: 0.0.40
codegen_flags: <defaults>
</compile_context>

<pallas_src>
import jax
import jax.numpy as jnp
from jax.experimental import pallas as pl
from jax.experimental.pallas import tpu as pltpu


IMG_SIZE = 28                      # 'mnist' dataset
IN_DIM = IMG_SIZE * IMG_SIZE       # 784
ENC_DIMS = [IN_DIM, 128, 64, 12, 3]
DEC_DIMS = [3, 12, 64, 128, IN_DIM]
LAYER_DIMS = (list(zip(ENC_DIMS[:-1], ENC_DIMS[1:])) +
              list(zip(DEC_DIMS[:-1], DEC_DIMS[1:])))          # 8 (in, out) pairs

LANE = 128
LATENT = ENC_DIMS[-1]                                          # 3


def _round_up(n, m):
    return ((n + m - 1) // m) * m


# Lane/MXU-friendly padded layer widths used *inside* the kernel.
# Inner layers pad to 128; the first input (784) and the final output (784)
# stay at their true width (full-array last dim => no wasted HBM bytes).
IN_PADS = [IN_DIM] + [_round_up(d, LANE) for (d, _) in LAYER_DIMS[1:]]
OUT_PADS = [_round_up(d, LANE) for (_, d) in LAYER_DIMS[:-1]] + [IN_DIM]
                                                               # [128]*7 + [784]

BIAS_OFFS = [0]
for _w in OUT_PADS[:-1]:
    BIAS_OFFS.append(BIAS_OFFS[-1] + _w)
BIAS_TOTAL = BIAS_OFFS[-1] + OUT_PADS[-1]                      # 1680


def _ae_kernel(x_ref,
               w1, w2, w3, w4, w5, w6, w7, w8,
               b_ref,
               enc_ref, dec_ref):
    """Full encoder+decoder forward on one (TILE_B, ...) row block.

    Weights are bf16 (zero-padded to lane-multiples on the inner layers); dots
    accumulate in f32; bias add / tanh / sigmoid run in f32 (v5e-safe).
    """
    f32 = jnp.float32
    bf16 = jnp.bfloat16

    def bias(i):
        off = BIAS_OFFS[i]                                # static, lane-aligned start
        return b_ref[:, off:off + OUT_PADS[i]]

    def dense(a_bf16, w_ref, i):
        return jnp.dot(a_bf16, w_ref[...], preferred_element_type=f32) + bias(i)

    h = x_ref[...].astype(bf16)

    # ---- encoder: Linear->Tanh x3, then Linear (no activation) ----
    h = jnp.tanh(dense(h, w1, 0)).astype(bf16)
    h = jnp.tanh(dense(h, w2, 1)).astype(bf16)
    h = jnp.tanh(dense(h, w3, 2)).astype(bf16)
    enc = dense(h, w4, 3)                                 # (TILE_B, 128) f32; cols 3.. exactly 0
    enc_ref[...] = enc[:, :LATENT].astype(enc_ref.dtype)  # store true 3-wide latent

    # ---- decoder: Linear->Tanh x3, then Linear->Sigmoid ----
    d = enc.astype(bf16)
    d = jnp.tanh(dense(d, w5, 4)).astype(bf16)
    d = jnp.tanh(dense(d, w6, 5)).astype(bf16)
    d = jnp.tanh(dense(d, w7, 6)).astype(bf16)
    logits = dense(d, w8, 7)                              # (TILE_B, 784) f32
    dec_ref[...] = jax.nn.sigmoid(logits).astype(dec_ref.dtype)


def _pick_tile_b(B):
    """HBM-bound kernel: biggest comfortable tile wins (measured ~85% of HBM
    roofline at 512/1024 rows vs ~63% at 256), but keep the grid length >= 2
    whenever possible so the 'parallel' batch axis shards across the two v7x
    TensorCores.  VMEM stays well under the 32 MiB limit even at 1024 rows."""
    max_tile = 1024 if B >= 4096 else 512
    tile = _round_up(pl.cdiv(B, 2), 8)
    return max(8, min(max_tile, tile))


@jax.jit
def autoencoder_forward(x, weights, biases):
    """x: (B, 784) f32 (bf16 also accepted -- the kernel casts before the first
    dot, so a bf16 producer halves the input read with no numeric change).
    weights: tuple of 8 lane-padded bf16 (in_p, out_p) arrays.
    biases:  (1, 1680) f32 packed biases.

    Returns (encoded (B, 3) f32, decoded (B, 784) bf16)."""
    B = x.shape[0]
    tile_b = _pick_tile_b(B)
    grid = (pl.cdiv(B, tile_b),)       # ragged final block masked by Pallas

    def row_spec(width):
        return pl.BlockSpec((tile_b, width), lambda i: (i, 0))

    def const_spec(arr):
        # Full-array block, constant index map -> fetched once, stays
        # VMEM-resident across all grid iterations.
        return pl.BlockSpec(arr.shape, lambda i: (0, 0))

    # Advisory cost so XLA can overlap the custom call with surrounding ops.
    flops_per_row = 2 * (2 * IN_DIM * LANE + 6 * LANE * LANE)
    transc_per_row = 6 * LANE + IN_DIM
    weight_bytes = sum(int(w.size) * w.dtype.itemsize for w in weights)
    cost = pl.CostEstimate(
        flops=flops_per_row * B,
        transcendentals=transc_per_row * B,
        bytes_accessed=(B * IN_DIM * x.dtype.itemsize + weight_bytes +
                        BIAS_TOTAL * 4 + B * LATENT * 4 + B * IN_DIM * 2),
    )

    encoded, decoded = pl.pallas_call(
        _ae_kernel,
        out_shape=(
            jax.ShapeDtypeStruct((B, LATENT), jnp.float32),
            jax.ShapeDtypeStruct((B, IN_DIM), jnp.bfloat16),
        ),
        grid=grid,
        in_specs=([row_spec(IN_DIM)] +
                  [const_spec(w) for w in weights] +
                  [const_spec(biases)]),
        out_specs=(row_spec(LATENT), row_spec(IN_DIM)),
        compiler_params=pltpu.CompilerParams(
            dimension_semantics=("parallel",),
            vmem_limit_bytes=32 * 1024 * 1024,
        ),
        cost_estimate=cost,
    )(x, *weights, biases)
    return encoded, decoded


def init_params(key):
    """Deterministic init matching nn.Linear default (U(-1/sqrt(in), 1/sqrt(in))).

    Weights are stored transposed, shape (in_features, out_features), so the
    kernel does x @ Wt + b.  Biases are stored as (1, out_features).
    """
    params = []
    for (fan_in, fan_out) in LAYER_DIMS:
        key, kw, kb = jax.random.split(key, 3)
        bound = 1.0 / jnp.sqrt(jnp.float32(fan_in))
        w_t = jax.random.uniform(kw, (fan_in, fan_out), jnp.float32,
                                 minval=-bound, maxval=bound)
        b = jax.random.uniform(kb, (1, fan_out), jnp.float32,
                               minval=-bound, maxval=bound)
        params.extend([w_t, b])
    return params


def pack_params(params):
    """Zero-pad weights/biases to the kernel's lane-friendly shapes, cast
    weights to bf16, and pack all biases into a single (1, 1680) f32 array.

    Zero padding is exact: padded weight rows/cols contribute 0 and padded
    bias lanes are 0, so padded activation columns are exactly 0."""
    weights = []
    bias_chunks = []
    for i, (in_p, out_p) in enumerate(zip(IN_PADS, OUT_PADS)):
        w = params[2 * i]
        b = params[2 * i + 1]
        wp = jnp.pad(w, ((0, in_p - w.shape[0]), (0, out_p - w.shape[1])))
        weights.append(wp.astype(jnp.bfloat16))
        bias_chunks.append(jnp.pad(b, ((0, 0), (0, out_p - b.shape[1]))))
    biases = jnp.concatenate(bias_chunks, axis=1).astype(jnp.float32)
    return tuple(weights), biases


def reference_forward(x, params):
    """Plain-JAX reference emulating the kernel's arithmetic
    (bf16 dot inputs, f32 accumulation, f32 activations)."""
    bf16 = jnp.bfloat16
    f32 = jnp.float32

    def dense(a, w, b):
        return jnp.dot(a.astype(bf16), w.astype(bf16),
                       preferred_element_type=f32) + b

    h = x
    for i in range(3):
        h = jnp.tanh(dense(h, params[2 * i], params[2 * i + 1]))
    enc = dense(h, params[6], params[7])
    d = enc
    for i in range(4, 7):
        d = jnp.tanh(dense(d, params[2 * i], params[2 * i + 1]))
    dec = jax.nn.sigmoid(dense(d, params[14], params[15]))
    return enc, dec


if __name__ == "__main__":
    key = jax.random.PRNGKey(0)
    key, kx = jax.random.split(key)

    B = 8
    x = jax.random.normal(kx, (B, IN_DIM), jnp.float32)
    params = init_params(key)
    weights, biases = pack_params(params)

    encoded, decoded = autoencoder_forward(x, weights, biases)
    jax.block_until_ready((encoded, decoded))

    # sanity check against pure-JAX reference (same bf16-in / f32-acc math)
    enc_expect, dec_expect = reference_forward(x, params)
    assert encoded.shape == (B, LATENT) and decoded.shape == (B, IN_DIM)
    assert jnp.allclose(encoded, enc_expect, atol=1e-2, rtol=1e-2), \
        float(jnp.max(jnp.abs(encoded - enc_expect)))
    dec_f32 = decoded.astype(jnp.float32)
    assert jnp.allclose(dec_f32, dec_expect, atol=1e-2, rtol=1e-2), \
        float(jnp.max(jnp.abs(dec_f32 - dec_expect)))

    print("KERNEL_OK")
</pallas_src>

<mosaic_0001>
module attributes {stable_mosaic.version = 11 : i64} {
  func.func @_ae_kernel(%arg0: i32, %arg1: memref<8x784xf32, #tpu.memory_space<vmem>>, %arg2: memref<784x128xbf16, #tpu.memory_space<vmem>>, %arg3: memref<128x128xbf16, #tpu.memory_space<vmem>>, %arg4: memref<128x128xbf16, #tpu.memory_space<vmem>>, %arg5: memref<128x128xbf16, #tpu.memory_space<vmem>>, %arg6: memref<128x128xbf16, #tpu.memory_space<vmem>>, %arg7: memref<128x128xbf16, #tpu.memory_space<vmem>>, %arg8: memref<128x128xbf16, #tpu.memory_space<vmem>>, %arg9: memref<128x784xbf16, #tpu.memory_space<vmem>>, %arg10: memref<1x1680xf32, #tpu.memory_space<vmem>>, %arg11: memref<8x3xf32, #tpu.memory_space<vmem>>, %arg12: memref<8x784xbf16, #tpu.memory_space<vmem>>) attributes {dimension_semantics = [#tpu.dimension_semantics<parallel>], iteration_bounds = array<i64: 1>, scalar_prefetch = 0 : i64, scratch_operands = 0 : i64, tpu.core_type = #tpu.core_type<tc>, window_params = [{transform_indices = @transform_0, window_bounds = array<i64: 8, 784>}, {pipeline_mode = #tpu.pipeline_mode<synchronous>, transform_indices = @transform_1, window_bounds = array<i64: 784, 128>}, {pipeline_mode = #tpu.pipeline_mode<synchronous>, transform_indices = @transform_2, window_bounds = array<i64: 128, 128>}, {pipeline_mode = #tpu.pipeline_mode<synchronous>, transform_indices = @transform_3, window_bounds = array<i64: 128, 128>}, {pipeline_mode = #tpu.pipeline_mode<synchronous>, transform_indices = @transform_4, window_bounds = array<i64: 128, 128>}, {pipeline_mode = #tpu.pipeline_mode<synchronous>, transform_indices = @transform_5, window_bounds = array<i64: 128, 128>}, {pipeline_mode = #tpu.pipeline_mode<synchronous>, transform_indices = @transform_6, window_bounds = array<i64: 128, 128>}, {pipeline_mode = #tpu.pipeline_mode<synchronous>, transform_indices = @transform_7, window_bounds = array<i64: 128, 128>}, {pipeline_mode = #tpu.pipeline_mode<synchronous>, transform_indices = @transform_8, window_bounds = array<i64: 128, 784>}, {pipeline_mode = #tpu.pipeline_mode<synchronous>, transform_indices = @transform_9, window_bounds = array<i64: 1, 1680>}, {transform_indices = @transform_10, window_bounds = array<i64: 8, 3>}, {transform_indices = @transform_11, window_bounds = array<i64: 8, 784>}]} {
    %c0 = arith.constant 0 : index
    %c0_0 = arith.constant 0 : index
    %0 = vector.load %arg1[%c0, %c0_0] : memref<8x784xf32, #tpu.memory_space<vmem>>, vector<8x784xf32>
    %1 = arith.truncf %0 : vector<8x784xf32> to vector<8x784xbf16>
    %c0_1 = arith.constant 0 : index
    %c0_2 = arith.constant 0 : index
    %2 = vector.load %arg2[%c0_1, %c0_2] : memref<784x128xbf16, #tpu.memory_space<vmem>>, vector<784x128xbf16>
    %cst = arith.constant dense<0.000000e+00> : vector<8x128xf32>
    %3 = tpu.matmul %1, %2, %cst {dimension_numbers = #tpu.dot_dimension_numbers<[1], [0], [0], [1], [0, 0, 1, 1], [], []>} : vector<8x784xbf16>, vector<784x128xbf16>, vector<8x128xf32> -> vector<8x128xf32>
    %c0_3 = arith.constant 0 : index
    %c0_4 = arith.constant 0 : index
    %4 = vector.load %arg10[%c0_3, %c0_4] : memref<1x1680xf32, #tpu.memory_space<vmem>>, vector<1x128xf32>
    %5 = vector.broadcast %4 : vector<1x128xf32> to vector<8x128xf32>
    %6 = arith.addf %3, %5 : vector<8x128xf32>
    %7 = math.tanh %6 : vector<8x128xf32>
    %8 = arith.truncf %7 : vector<8x128xf32> to vector<8x128xbf16>
    %c0_5 = arith.constant 0 : index
    %c0_6 = arith.constant 0 : index
    %9 = vector.load %arg3[%c0_5, %c0_6] : memref<128x128xbf16, #tpu.memory_space<vmem>>, vector<128x128xbf16>
    %cst_7 = arith.constant dense<0.000000e+00> : vector<8x128xf32>
    %10 = tpu.matmul %8, %9, %cst_7 {dimension_numbers = #tpu.dot_dimension_numbers<[1], [0], [0], [1], [0, 0, 1, 1], [], []>} : vector<8x128xbf16>, vector<128x128xbf16>, vector<8x128xf32> -> vector<8x128xf32>
    %c0_8 = arith.constant 0 : index
    %c128 = arith.constant 128 : index
    %11 = vector.load %arg10[%c0_8, %c128] : memref<1x1680xf32, #tpu.memory_space<vmem>>, vector<1x128xf32>
    %12 = vector.broadcast %11 : vector<1x128xf32> to vector<8x128xf32>
    %13 = arith.addf %10, %12 : vector<8x128xf32>
    %14 = math.tanh %13 : vector<8x128xf32>
    %15 = arith.truncf %14 : vector<8x128xf32> to vector<8x128xbf16>
    %c0_9 = arith.constant 0 : index
    %c0_10 = arith.constant 0 : index
    %16 = vector.load %arg4[%c0_9, %c0_10] : memref<128x128xbf16, #tpu.memory_space<vmem>>, vector<128x128xbf16>
    %cst_11 = arith.constant dense<0.000000e+00> : vector<8x128xf32>
    %17 = tpu.matmul %15, %16, %cst_11 {dimension_numbers = #tpu.dot_dimension_numbers<[1], [0], [0], [1], [0, 0, 1, 1], [], []>} : vector<8x128xbf16>, vector<128x128xbf16>, vector<8x128xf32> -> vector<8x128xf32>
    %c0_12 = arith.constant 0 : index
    %c256 = arith.constant 256 : index
    %18 = vector.load %arg10[%c0_12, %c256] : memref<1x1680xf32, #tpu.memory_space<vmem>>, vector<1x128xf32>
    %19 = vector.broadcast %18 : vector<1x128xf32> to vector<8x128xf32>
    %20 = arith.addf %17, %19 : vector<8x128xf32>
    %21 = math.tanh %20 : vector<8x128xf32>
    %22 = arith.truncf %21 : vector<8x128xf32> to vector<8x128xbf16>
    %c0_13 = arith.constant 0 : index
    %c0_14 = arith.constant 0 : index
    %23 = vector.load %arg5[%c0_13, %c0_14] : memref<128x128xbf16, #tpu.memory_space<vmem>>, vector<128x128xbf16>
    %cst_15 = arith.constant dense<0.000000e+00> : vector<8x128xf32>
    %24 = tpu.matmul %22, %23, %cst_15 {dimension_numbers = #tpu.dot_dimension_numbers<[1], [0], [0], [1], [0, 0, 1, 1], [], []>} : vector<8x128xbf16>, vector<128x128xbf16>, vector<8x128xf32> -> vector<8x128xf32>
    %c0_16 = arith.constant 0 : index
    %c384 = arith.constant 384 : index
    %25 = vector.load %arg10[%c0_16, %c384] : memref<1x1680xf32, #tpu.memory_space<vmem>>, vector<1x128xf32>
    %26 = vector.broadcast %25 : vector<1x128xf32> to vector<8x128xf32>
    %27 = arith.addf %24, %26 : vector<8x128xf32>
    %28 = vector.extract_strided_slice %27 {offsets = [0, 0], sizes = [8, 3], strides = [1, 1]} : vector<8x128xf32> to vector<8x3xf32>
    %c0_17 = arith.constant 0 : index
    %c0_18 = arith.constant 0 : index
    %29 = vector.load %arg11[%c0_17, %c0_18] : memref<8x3xf32, #tpu.memory_space<vmem>>, vector<8x3xf32>
    tpu.vector_store %arg11[%c0_17, %c0_18], %28 {strides = array<i32>} : memref<8x3xf32, #tpu.memory_space<vmem>>, vector<8x3xf32>,
    %30 = arith.truncf %27 : vector<8x128xf32> to vector<8x128xbf16>
    %c0_19 = arith.constant 0 : index
    %c0_20 = arith.constant 0 : index
    %31 = vector.load %arg6[%c0_19, %c0_20] : memref<128x128xbf16, #tpu.memory_space<vmem>>, vector<128x128xbf16>
    %cst_21 = arith.constant dense<0.000000e+00> : vector<8x128xf32>
    %32 = tpu.matmul %30, %31, %cst_21 {dimension_numbers = #tpu.dot_dimension_numbers<[1], [0], [0], [1], [0, 0, 1, 1], [], []>} : vector<8x128xbf16>, vector<128x128xbf16>, vector<8x128xf32> -> vector<8x128xf32>
    %c0_22 = arith.constant 0 : index
    %c512 = arith.constant 512 : index
    %33 = vector.load %arg10[%c0_22, %c512] : memref<1x1680xf32, #tpu.memory_space<vmem>>, vector<1x128xf32>
    %34 = vector.broadcast %33 : vector<1x128xf32> to vector<8x128xf32>
    %35 = arith.addf %32, %34 : vector<8x128xf32>
    %36 = math.tanh %35 : vector<8x128xf32>
    %37 = arith.truncf %36 : vector<8x128xf32> to vector<8x128xbf16>
    %c0_23 = arith.constant 0 : index
    %c0_24 = arith.constant 0 : index
    %38 = vector.load %arg7[%c0_23, %c0_24] : memref<128x128xbf16, #tpu.memory_space<vmem>>, vector<128x128xbf16>
    %cst_25 = arith.constant dense<0.000000e+00> : vector<8x128xf32>
    %39 = tpu.matmul %37, %38, %cst_25 {dimension_numbers = #tpu.dot_dimension_numbers<[1], [0], [0], [1], [0, 0, 1, 1], [], []>} : vector<8x128xbf16>, vector<128x128xbf16>, vector<8x128xf32> -> vector<8x128xf32>
    %c0_26 = arith.constant 0 : index
    %c640 = arith.constant 640 : index
    %40 = vector.load %arg10[%c0_26, %c640] : memref<1x1680xf32, #tpu.memory_space<vmem>>, vector<1x128xf32>
    %41 = vector.broadcast %40 : vector<1x128xf32> to vector<8x128xf32>
    %42 = arith.addf %39, %41 : vector<8x128xf32>
    %43 = math.tanh %42 : vector<8x128xf32>
    %44 = arith.truncf %43 : vector<8x128xf32> to vector<8x128xbf16>
    %c0_27 = arith.constant 0 : index
    %c0_28 = arith.constant 0 : index
    %45 = vector.load %arg8[%c0_27, %c0_28] : memref<128x128xbf16, #tpu.memory_space<vmem>>, vector<128x128xbf16>
    %cst_29 = arith.constant dense<0.000000e+00> : vector<8x128xf32>
    %46 = tpu.matmul %44, %45, %cst_29 {dimension_numbers = #tpu.dot_dimension_numbers<[1], [0], [0], [1], [0, 0, 1, 1], [], []>} : vector<8x128xbf16>, vector<128x128xbf16>, vector<8x128xf32> -> vector<8x128xf32>
    %c0_30 = arith.constant 0 : index
    %c768 = arith.constant 768 : index
    %47 = vector.load %arg10[%c0_30, %c768] : memref<1x1680xf32, #tpu.memory_space<vmem>>, vector<1x128xf32>
    %48 = vector.broadcast %47 : vector<1x128xf32> to vector<8x128xf32>
    %49 = arith.addf %46, %48 : vector<8x128xf32>
    %50 = math.tanh %49 : vector<8x128xf32>
    %51 = arith.truncf %50 : vector<8x128xf32> to vector<8x128xbf16>
    %c0_31 = arith.constant 0 : index
    %c0_32 = arith.constant 0 : index
    %52 = vector.load %arg9[%c0_31, %c0_32] : memref<128x784xbf16, #tpu.memory_space<vmem>>, vector<128x784xbf16>
    %cst_33 = arith.constant dense<0.000000e+00> : vector<8x784xf32>
    %53 = tpu.matmul %51, %52, %cst_33 {dimension_numbers = #tpu.dot_dimension_numbers<[1], [0], [0], [1], [0, 0, 1, 1], [], []>} : vector<8x128xbf16>, vector<128x784xbf16>, vector<8x784xf32> -> vector<8x784xf32>
    %c0_34 = arith.constant 0 : index
    %c896 = arith.constant 896 : index
    %54 = vector.load %arg10[%c0_34, %c896] : memref<1x1680xf32, #tpu.memory_space<vmem>>, vector<1x784xf32>
    %55 = vector.broadcast %54 : vector<1x784xf32> to vector<8x784xf32>
    %56 = arith.addf %53, %55 : vector<8x784xf32>
    %57 = arith.negf %56 : vector<8x784xf32>
    %58 = math.exp %57 : vector<8x784xf32>
    %cst_35 = arith.constant 1.000000e+00 : f32
    %59 = vector.broadcast %cst_35 : f32 to vector<8x784xf32>
    %60 = arith.addf %59, %58 : vector<8x784xf32>
    %61 = arith.divf %59, %60 : vector<8x784xf32>
    %62 = arith.truncf %61 : vector<8x784xf32> to vector<8x784xbf16>
    %c0_36 = arith.constant 0 : index
    %c0_37 = arith.constant 0 : index
    %63 = vector.load %arg12[%c0_36, %c0_37] : memref<8x784xbf16, #tpu.memory_space<vmem>>, vector<8x784xbf16>
    tpu.vector_store %arg12[%c0_36, %c0_37], %62 {strides = array<i32>} : memref<8x784xbf16, #tpu.memory_space<vmem>>, vector<8x784xbf16>,
    return
  }
  func.func @transform_0(%arg0: i32) -> (i32, i32) {
    %c0_i32 = arith.constant 0 : i32
    %c0_i32_0 = arith.constant 0 : i32
    return %arg0, %c0_i32 : i32, i32
  }
  func.func @transform_1(%arg0: i32) -> (i32, i32) {
    %c0_i32 = arith.constant 0 : i32
    %c0_i32_0 = arith.constant 0 : i32
    %c0_i32_1 = arith.constant 0 : i32
    return %c0_i32, %c0_i32_0 : i32, i32
  }
  func.func @transform_2(%arg0: i32) -> (i32, i32) {
    %c0_i32 = arith.constant 0 : i32
    %c0_i32_0 = arith.constant 0 : i32
    %c0_i32_1 = arith.constant 0 : i32
    return %c0_i32, %c0_i32_0 : i32, i32
  }
  func.func @transform_3(%arg0: i32) -> (i32, i32) {
    %c0_i32 = arith.constant 0 : i32
    %c0_i32_0 = arith.constant 0 : i32
    %c0_i32_1 = arith.constant 0 : i32
    return %c0_i32, %c0_i32_0 : i32, i32
  }
  func.func @transform_4(%arg0: i32) -> (i32, i32) {
    %c0_i32 = arith.constant 0 : i32
    %c0_i32_0 = arith.constant 0 : i32
    %c0_i32_1 = arith.constant 0 : i32
    return %c0_i32, %c0_i32_0 : i32, i32
  }
  func.func @transform_5(%arg0: i32) -> (i32, i32) {
    %c0_i32 = arith.constant 0 : i32
    %c0_i32_0 = arith.constant 0 : i32
    %c0_i32_1 = arith.constant 0 : i32
    return %c0_i32, %c0_i32_0 : i32, i32
  }
  func.func @transform_6(%arg0: i32) -> (i32, i32) {
    %c0_i32 = arith.constant 0 : i32
    %c0_i32_0 = arith.constant 0 : i32
    %c0_i32_1 = arith.constant 0 : i32
    return %c0_i32, %c0_i32_0 : i32, i32
  }
  func.func @transform_7(%arg0: i32) -> (i32, i32) {
    %c0_i32 = arith.constant 0 : i32
    %c0_i32_0 = arith.constant 0 : i32
    %c0_i32_1 = arith.constant 0 : i32
    return %c0_i32, %c0_i32_0 : i32, i32
  }
  func.func @transform_8(%arg0: i32) -> (i32, i32) {
    %c0_i32 = arith.constant 0 : i32
    %c0_i32_0 = arith.constant 0 : i32
    %c0_i32_1 = arith.constant 0 : i32
    return %c0_i32, %c0_i32_0 : i32, i32
  }
  func.func @transform_9(%arg0: i32) -> (i32, i32) {
    %c0_i32 = arith.constant 0 : i32
    %c0_i32_0 = arith.constant 0 : i32
    %c0_i32_1 = arith.constant 0 : i32
    return %c0_i32, %c0_i32_0 : i32, i32
  }
  func.func @transform_10(%arg0: i32) -> (i32, i32) {
    %c0_i32 = arith.constant 0 : i32
    %c0_i32_0 = arith.constant 0 : i32
    return %arg0, %c0_i32 : i32, i32
  }
  func.func @transform_11(%arg0: i32) -> (i32, i32) {
    %c0_i32 = arith.constant 0 : i32
    %c0_i32_0 = arith.constant 0 : i32
    return %arg0, %c0_i32 : i32, i32
  }
}

</mosaic_0001>

<llo_original>
// kernel: autoencoder_forward.1
$region0: #{autoencoder_forward.1}
  #allocation0 [shape = 'u32[]', space=smem, size = 0x4, offset = 0x4, fixed_abs, tag = 'smem constant byte address 0x4 - core index']
  #allocation1 [shape = 'u32[144,128]{1,0:T(1,128)}', space=vmem, size = 0x12000, scoped, tag = 'internal scratch']
  %s0 = inlined_call_operand.vmem [shape: f32[8,784], index: 0, kind: input, shape index: {}]
  %s1 = inlined_call_operand.vmem [shape: bf16[784,128], index: 1, kind: input, shape index: {}]
  %s2 = inlined_call_operand.vmem [shape: bf16[128,128], index: 2, kind: input, shape index: {}]
  %s3 = inlined_call_operand.vmem [shape: bf16[128,128], index: 3, kind: input, shape index: {}]
  %s4 = inlined_call_operand.vmem [shape: bf16[128,128], index: 4, kind: input, shape index: {}]
  %s5 = inlined_call_operand.vmem [shape: bf16[128,128], index: 5, kind: input, shape index: {}]
  %s6 = inlined_call_operand.vmem [shape: bf16[128,128], index: 6, kind: input, shape index: {}]
  %s7 = inlined_call_operand.vmem [shape: bf16[128,128], index: 7, kind: input, shape index: {}]
  %s8 = inlined_call_operand.vmem [shape: bf16[128,784], index: 8, kind: input, shape index: {}]
  %s9 = inlined_call_operand.vmem [shape: f32[1,1680], index: 9, kind: input, shape index: {}]
  %s10 = inlined_call_operand.vmem [shape: f32[8,3], index: 10, kind: output, shape index: {0}]
  %s11 = inlined_call_operand.hbm [shape: bf16[8,784], index: 11, kind: output, shape index: {1}]
  %12 = xla_tuple %s10, %s11
  %s13 = sld [smem:[#allocation0]]
  $region58: #{autoencoder_forward.1} parent=0
    _
  %s15 = ssub.s32 1, %s13
  %s16 = scalar_select 0, %s15, %s13
  $region1: #{autoencoder_forward.1} parent=0
    #allocation2 [shape = 'u8[14336]{0}', space=vmem, size = 0x3800, scoped, tag = 'output window, operand 1, single buffered']
    #allocation3 [shape = 's32[1]{0}', space=sflag, size = 0x4, scoped, tag = 'scoped memory for autoencoder_forward.1']
    %17 = vsyncpa [#allocation3], 0
    // Predicated region
    $region2: #{autoencoder_forward.1} parent=1 // pred_check
      _
    $region3: #{autoencoder_forward.1} parent=1 // pred_check_branch
      %19 = sbr.rel (0) target = $region5
    $region4: #{autoencoder_forward.1} parent=1 // pred_region
      _
    $region5: #{autoencoder_forward.1} parent=1 // pred_fallthru
      _
    // Predicated region
    $region6: #{autoencoder_forward.1} parent=1 // pred_check
      _
    $region7: #{autoencoder_forward.1} parent=1 // pred_check_branch
      %21 = sbr.rel (0) target = $region9
    $region8: #{autoencoder_forward.1} parent=1 // pred_region
      _
    $region9: #{autoencoder_forward.1} parent=1 // pred_fallthru
      _
    // Predicated region
    $region10: #{autoencoder_forward.1} parent=1 // pred_check
      _
    $region11: #{autoencoder_forward.1} parent=1 // pred_check_branch
      %23 = sbr.rel (0) target = $region13
    $region12: #{autoencoder_forward.1} parent=1 // pred_region
      _
    $region13: #{autoencoder_forward.1} parent=1 // pred_fallthru
      _
    // Predicated region
    $region14: #{autoencoder_forward.1} parent=1 // pred_check
      _
    $region15: #{autoencoder_forward.1} parent=1 // pred_check_branch
      %25 = sbr.rel (0) target = $region17
    $region16: #{autoencoder_forward.1} parent=1 // pred_region
      _
    $region17: #{autoencoder_forward.1} parent=1 // pred_fallthru
      _
    // Predicated region
    $region18: #{autoencoder_forward.1} parent=1 // pred_check
      _
    $region19: #{autoencoder_forward.1} parent=1 // pred_check_branch
      %27 = sbr.rel (0) target = $region21
    $region20: #{autoencoder_forward.1} parent=1 // pred_region
      _
    $region21: #{autoencoder_forward.1} parent=1 // pred_fallthru
      _
    // Predicated region
    $region22: #{autoencoder_forward.1} parent=1 // pred_check
      _
    $region23: #{autoencoder_forward.1} parent=1 // pred_check_branch
      %29 = sbr.rel (0) target = $region25
    $region24: #{autoencoder_forward.1} parent=1 // pred_region
      _
    $region25: #{autoencoder_forward.1} parent=1 // pred_fallthru
      _
    // Predicated region
    $region26: #{autoencoder_forward.1} parent=1 // pred_check
      _
    $region27: #{autoencoder_forward.1} parent=1 // pred_check_branch
      %31 = sbr.rel (0) target = $region29
    $region28: #{autoencoder_forward.1} parent=1 // pred_region
      _
    $region29: #{autoencoder_forward.1} parent=1 // pred_fallthru
      _
    // Predicated region
    $region30: #{autoencoder_forward.1} parent=1 // pred_check
      _
    $region31: #{autoencoder_forward.1} parent=1 // pred_check_branch
      %33 = sbr.rel (0) target = $region33
    $region32: #{autoencoder_forward.1} parent=1 // pred_region
      _
    $region33: #{autoencoder_forward.1} parent=1 // pred_fallthru
      _
    // Predicated region
    $region34: #{autoencoder_forward.1} parent=1 // pred_check
      _
    $region35: #{autoencoder_forward.1} parent=1 // pred_check_branch
      %35 = sbr.rel (0) target = $region37
    $region36: #{autoencoder_forward.1} parent=1 // pred_region
      _
    $region37: #{autoencoder_forward.1} parent=1 // pred_fallthru
      _
    // Predicated region
    $region38: #{autoencoder_forward.1} parent=1 // pred_check
      _
    $region39: #{autoencoder_forward.1} parent=1 // pred_check_branch
      %37 = sbr.rel (0) target = $region41
    $region40: #{autoencoder_forward.1} parent=1 // pred_region
      _
    $region41: #{autoencoder_forward.1} parent=1 // pred_fallthru
      _
    %v39 = vld [vmem:[%s0] sm:$0xff]
    %v40 = vld [vmem:[%s0 + $0x8] sm:$0xff]
    %v41 = vld [vmem:[%s0 + $0x10] sm:$0xff]
    %v42 = vld [vmem:[%s0 + $0x18] sm:$0xff]
    %v43 = vld [vmem:[%s0 + $0x20] sm:$0xff]
    %v44 = vld [vmem:[%s0 + $0x28] sm:$0xff]
    %v45 = vld [vmem:[%s0 + $0x30] sm:$0xff]
    %v46 = vpack.c.bf16 %v39, %v39
    %v47 = vpack.c.bf16 %v40, %v40
    %v48 = vpack.c.bf16 %v41, %v41
    %v49 = vpack.c.bf16 %v42, %v42
    %v50 = vpack.c.bf16 %v43, %v43
    %v51 = vpack.c.bf16 %v44, %v44
    %v52 = vpack.c.bf16 %v45, %v45
    %v53 = vld [vmem:[%s1] sm:$0xf]
    %v54 = vld [vmem:[%s1 + $0x4] sm:$0xf]
    %v55 = vld [vmem:[%s1 + $0x8] sm:$0xf]
    %v56 = vld [vmem:[%s1 + $0xc] sm:$0xf]
    %v57 = vld [vmem:[%s1 + $0x10] sm:$0xf]
    %v58 = vld [vmem:[%s1 + $0x14] sm:$0xf]
    %v59 = vld [vmem:[%s1 + $0x18] sm:$0xf]
    %v60 = vld [vmem:[%s1 + $0x1c] sm:$0xf]
    %v61 = vld [vmem:[%s1 + $0x20] sm:$0xf]
    %v62 = vld [vmem:[%s1 + $0x24] sm:$0xf]
    %v63 = vld [vmem:[%s1 + $0x28] sm:$0xf]
    %v64 = vld [vmem:[%s1 + $0x2c] sm:$0xf]
    %v65 = vld [vmem:[%s1 + $0x30] sm:$0xf]
    %v66 = vld [vmem:[%s1 + $0x34] sm:$0xf]
    %v67 = vld [vmem:[%s1 + $0x38] sm:$0xf]
    %v68 = vld [vmem:[%s1 + $0x3c] sm:$0xf]
    %v69 = vld [vmem:[%s1 + $0x40] sm:$0xf]
    %v70 = vld [vmem:[%s1 + $0x44] sm:$0xf]
    %v71 = vld [vmem:[%s1 + $0x48] sm:$0xf]
    %v72 = vld [vmem:[%s1 + $0x4c] sm:$0xf]
    %v73 = vld [vmem:[%s1 + $0x50] sm:$0xf]
    %v74 = vld [vmem:[%s1 + $0x54] sm:$0xf]
    %v75 = vld [vmem:[%s1 + $0x58] sm:$0xf]
    %v76 = vld [vmem:[%s1 + $0x5c] sm:$0xf]
    %v77 = vld [vmem:[%s1 + $0x60] sm:$0xf]
    %v78 = vld [vmem:[%s1 + $0x64] sm:$0xf]
    %v79 = vld [vmem:[%s1 + $0x68] sm:$0xf]
    %v80 = vld [vmem:[%s1 + $0x6c] sm:$0xf]
    %v81 = vld [vmem:[%s1 + $0x70] sm:$0xf]
    %v82 = vld [vmem:[%s1 + $0x74] sm:$0xf]
    %v83 = vld [vmem:[%s1 + $0x78] sm:$0xf]
    %v84 = vld [vmem:[%s1 + $0x7c] sm:$0xf]
    %v85 = vld [vmem:[%s1 + $0x80] sm:$0xf]
    %v86 = vld [vmem:[%s1 + $0x84] sm:$0xf]
    %v87 = vld [vmem:[%s1 + $0x88] sm:$0xf]
    %v88 = vld [vmem:[%s1 + $0x8c] sm:$0xf]
    %v89 = vld [vmem:[%s1 + $0x90] sm:$0xf]
    %v90 = vld [vmem:[%s1 + $0x94] sm:$0xf]
    %v91 = vld [vmem:[%s1 + $0x98] sm:$0xf]
    %v92 = vld [vmem:[%s1 + $0x9c] sm:$0xf]
    %v93 = vld [vmem:[%s1 + $0xa0] sm:$0xf]
    %v94 = vld [vmem:[%s1 + $0xa4] sm:$0xf]
    %v95 = vld [vmem:[%s1 + $0xa8] sm:$0xf]
    %v96 = vld [vmem:[%s1 + $0xac] sm:$0xf]
    %v97 = vld [vmem:[%s1 + $0xb0] sm:$0xf]
    %v98 = vld [vmem:[%s1 + $0xb4] sm:$0xf]
    %v99 = vld [vmem:[%s1 + $0xb8] sm:$0xf]
    %v100 = vld [vmem:[%s1 + $0xbc] sm:$0xf]
    %v101 = vld [vmem:[%s1 + $0xc0] sm:$0xf]
    %v102 = vld [vmem:[%s1 + $0xc4] sm:$0xf]
    %v103 = vld [vmem:[%s1 + $0xc8] sm:$0xf]
    %v104 = vld [vmem:[%s1 + $0xcc] sm:$0xf]
    %v105 = vld [vmem:[%s1 + $0xd0] sm:$0xf]
    %v106 = vld [vmem:[%s1 + $0xd4] sm:$0xf]
    %v107 = vld [vmem:[%s1 + $0xd8] sm:$0xf]
    %v108 = vld [vmem:[%s1 + $0xdc] sm:$0xf]
    %v109 = vld [vmem:[%s1 + $0xe0] sm:$0xf]
    %v110 = vld [vmem:[%s1 + $0xe4] sm:$0xf]
    %v111 = vld [vmem:[%s1 + $0xe8] sm:$0xf]
    %v112 = vld [vmem:[%s1 + $0xec] sm:$0xf]
    %v113 = vld [vmem:[%s1 + $0xf0] sm:$0xf]
    %v114 = vld [vmem:[%s1 + $0xf4] sm:$0xf]
    %v115 = vld [vmem:[%s1 + $0xf8] sm:$0xf]
    %v116 = vld [vmem:[%s1 + $0xfc] sm:$0xf]
    %v117 = vld [vmem:[%s1 + $0x100] sm:$0xf]
    %v118 = vld [vmem:[%s1 + $0x104] sm:$0xf]
    %v119 = vld [vmem:[%s1 + $0x108] sm:$0xf]
    %v120 = vld [vmem:[%s1 + $0x10c] sm:$0xf]
    %v121 = vld [vmem:[%s1 + $0x110] sm:$0xf]
    %v122 = vld [vmem:[%s1 + $0x114] sm:$0xf]
    %v123 = vld [vmem:[%s1 + $0x118] sm:$0xf]
    %v124 = vld [vmem:[%s1 + $0x11c] sm:$0xf]
    %v125 = vld [vmem:[%s1 + $0x120] sm:$0xf]
    %v126 = vld [vmem:[%s1 + $0x124] sm:$0xf]
    %v127 = vld [vmem:[%s1 + $0x128] sm:$0xf]
    %v128 = vld [vmem:[%s1 + $0x12c] sm:$0xf]
    %v129 = vld [vmem:[%s1 + $0x130] sm:$0xf]
    %v130 = vld [vmem:[%s1 + $0x134] sm:$0xf]
    %v131 = vld [vmem:[%s1 + $0x138] sm:$0xf]
    %v132 = vld [vmem:[%s1 + $0x13c] sm:$0xf]
    %v133 = vld [vmem:[%s1 + $0x140] sm:$0xf]
    %v134 = vld [vmem:[%s1 + $0x144] sm:$0xf]
    %v135 = vld [vmem:[%s1 + $0x148] sm:$0xf]
    %v136 = vld [vmem:[%s1 + $0x14c] sm:$0xf]
    %v137 = vld [vmem:[%s1 + $0x150] sm:$0xf]
    %v138 = vld [vmem:[%s1 + $0x154] sm:$0xf]
    %v139 = vld [vmem:[%s1 + $0x158] sm:$0xf]
    %v140 = vld [vmem:[%s1 + $0x15c] sm:$0xf]
    %v141 = vld [vmem:[%s1 + $0x160] sm:$0xf]
    %v142 = vld [vmem:[%s1 + $0x164] sm:$0xf]
    %v143 = vld [vmem:[%s1 + $0x168] sm:$0xf]
    %v144 = vld [vmem:[%s1 + $0x16c] sm:$0xf]
    %v145 = vld [vmem:[%s1 + $0x170] sm:$0xf]
    %v146 = vld [vmem:[%s1 + $0x174] sm:$0xf]
    %v147 = vld [vmem:[%s1 + $0x178] sm:$0xf]
    %v148 = vld [vmem:[%s1 + $0x17c] sm:$0xf]
    %v149 = vld [vmem:[%s1 + $0x180] sm:$0xf]
    %v150 = vld [vmem:[%s1 + $0x184] sm:$0xf]
    %v151 = vld [vmem:[%s9] sm:$0x1]
    %v153 = vlaneseq
    %v154 = vshrl.u32 %v153, 7
    %v155 = vsub.s32 0, %v154
    %v156 = vrot.slane %v151, %v155
    %v256 = vunpack.c.l.b16 %v53
    %v257 = vunpack.c.l.b16 %v54
    %v258 = vunpack.c.l.b16 %v55
    %v259 = vunpack.c.l.b16 %v56
    %v260 = vunpack.c.l.b16 %v57
    %v261 = vunpack.c.l.b16 %v58
    %v262 = vunpack.c.l.b16 %v59
    %v263 = vunpack.c.l.b16 %v60
    %v264 = vunpack.c.l.b16 %v61
    %v265 = vunpack.c.l.b16 %v62
    %v266 = vunpack.c.l.b16 %v63
    %v267 = vunpack.c.l.b16 %v64
    %v268 = vunpack.c.l.b16 %v65
    %v269 = vunpack.c.l.b16 %v66
    %v270 = vunpack.c.l.b16 %v67
    %v271 = vunpack.c.l.b16 %v68
    %v272 = vunpack.c.l.b16 %v69
    %v273 = vunpack.c.l.b16 %v70
    %v274 = vunpack.c.l.b16 %v71
    %v275 = vunpack.c.l.b16 %v72
    %v276 = vunpack.c.l.b16 %v73
    %v277 = vunpack.c.l.b16 %v74
    %v278 = vunpack.c.l.b16 %v75
    %v279 = vunpack.c.l.b16 %v76
    %v280 = vunpack.c.l.b16 %v77
    %v281 = vunpack.c.l.b16 %v78
    %v282 = vunpack.c.l.b16 %v79
    %v283 = vunpack.c.l.b16 %v80
    %v284 = vunpack.c.l.b16 %v81
    %v285 = vunpack.c.l.b16 %v82
    %v286 = vunpack.c.l.b16 %v83
    %v287 = vunpack.c.l.b16 %v84
    %v288 = vunpack.c.l.b16 %v85
    %v289 = vunpack.c.l.b16 %v86
    %v290 = vunpack.c.l.b16 %v87
    %v291 = vunpack.c.l.b16 %v88
    %v292 = vunpack.c.l.b16 %v89
    %v293 = vunpack.c.l.b16 %v90
    %v294 = vunpack.c.l.b16 %v91
    %v295 = vunpack.c.l.b16 %v92
    %v296 = vunpack.c.l.b16 %v93
    %v297 = vunpack.c.l.b16 %v94
    %v298 = vunpack.c.l.b16 %v95
    %v299 = vunpack.c.l.b16 %v96
    %v300 = vunpack.c.l.b16 %v97
    %v301 = vunpack.c.l.b16 %v98
    %v302 = vunpack.c.l.b16 %v99
    %v303 = vunpack.c.l.b16 %v100
    %v304 = vunpack.c.l.b16 %v101
    %v305 = vunpack.c.l.b16 %v102
    %v306 = vunpack.c.l.b16 %v103
    %v307 = vunpack.c.l.b16 %v104
    %v308 = vunpack.c.l.b16 %v105
    %v309 = vunpack.c.l.b16 %v106
    %v310 = vunpack.c.l.b16 %v107
    %v311 = vunpack.c.l.b16 %v108
    %v312 = vunpack.c.l.b16 %v109
    %v313 = vunpack.c.l.b16 %v110
    %v314 = vunpack.c.l.b16 %v111
    %v315 = vunpack.c.l.b16 %v112
    %v316 = vunpack.c.l.b16 %v113
    %v317 = vunpack.c.l.b16 %v114
    %v318 = vunpack.c.l.b16 %v115
    %v319 = vunpack.c.l.b16 %v116
    %v320 = vunpack.c.l.b16 %v117
    %v321 = vunpack.c.l.b16 %v118
    %v322 = vunpack.c.l.b16 %v119
    %v323 = vunpack.c.l.b16 %v120
    %v324 = vunpack.c.l.b16 %v121
    %v325 = vunpack.c.l.b16 %v122
    %v326 = vunpack.c.l.b16 %v123
    %v327 = vunpack.c.l.b16 %v124
    %v328 = vunpack.c.l.b16 %v125
    %v329 = vunpack.c.l.b16 %v126
    %v330 = vunpack.c.l.b16 %v127
    %v331 = vunpack.c.l.b16 %v128
    %v332 = vunpack.c.l.b16 %v129
    %v333 = vunpack.c.l.b16 %v130
    %v334 = vunpack.c.l.b16 %v131
    %v335 = vunpack.c.l.b16 %v132
    %v336 = vunpack.c.l.b16 %v133
    %v337 = vunpack.c.l.b16 %v134
    %v338 = vunpack.c.l.b16 %v135
    %v339 = vunpack.c.l.b16 %v136
    %v340 = vunpack.c.l.b16 %v137
    %v341 = vunpack.c.l.b16 %v138
    %v342 = vunpack.c.l.b16 %v139
    %v343 = vunpack.c.l.b16 %v140
    %v344 = vunpack.c.l.b16 %v141
    %v345 = vunpack.c.l.b16 %v142
    %v346 = vunpack.c.l.b16 %v143
    %v347 = vunpack.c.l.b16 %v144
    %v348 = vunpack.c.l.b16 %v145
    %v349 = vunpack.c.l.b16 %v146
    %v350 = vunpack.c.l.b16 %v147
    %v351 = vunpack.c.l.b16 %v148
    %v352 = vunpack.c.l.b16 %v149
    %v353 = vunpack.c.l.b16 %v150
    %v354 = vpack.c.b16 %v257, %v256
    %v355 = vpack.c.b16 %v259, %v258
    %v356 = vpack.c.b16 %v261, %v260
    %v357 = vpack.c.b16 %v263, %v262
    %v358 = vpack.c.b16 %v265, %v264
    %v359 = vpack.c.b16 %v267, %v266
    %v360 = vpack.c.b16 %v269, %v268
    %v361 = vpack.c.b16 %v271, %v270
    %v362 = vpack.c.b16 %v273, %v272
    %v363 = vpack.c.b16 %v275, %v274
    %v364 = vpack.c.b16 %v277, %v276
    %v365 = vpack.c.b16 %v279, %v278
    %v366 = vpack.c.b16 %v281, %v280
    %v367 = vpack.c.b16 %v283, %v282
    %v368 = vpack.c.b16 %v285, %v284
    %v369 = vpack.c.b16 %v287, %v286
    %v370 = vpack.c.b16 %v289, %v288
    %v371 = vpack.c.b16 %v291, %v290
    %v372 = vpack.c.b16 %v293, %v292
    %v373 = vpack.c.b16 %v295, %v294
    %v374 = vpack.c.b16 %v297, %v296
    %v375 = vpack.c.b16 %v299, %v298
    %v376 = vpack.c.b16 %v301, %v300
    %v377 = vpack.c.b16 %v303, %v302
    %v378 = vpack.c.b16 %v305, %v304
    %v379 = vpack.c.b16 %v307, %v306
    %v380 = vpack.c.b16 %v309, %v308
    %v381 = vpack.c.b16 %v311, %v310
    %v382 = vpack.c.b16 %v313, %v312
    %v383 = vpack.c.b16 %v315, %v314
    %v384 = vpack.c.b16 %v317, %v316
    %v385 = vpack.c.b16 %v319, %v318
    %v386 = vpack.c.b16 %v321, %v320
    %v387 = vpack.c.b16 %v323, %v322
    %v388 = vpack.c.b16 %v325, %v324
    %v389 = vpack.c.b16 %v327, %v326
    %v390 = vpack.c.b16 %v329, %v328
    %v391 = vpack.c.b16 %v331, %v330
    %v392 = vpack.c.b16 %v333, %v332
    %v393 = vpack.c.b16 %v335, %v334
    %v394 = vpack.c.b16 %v337, %v336
    %v395 = vpack.c.b16 %v339, %v338
    %v396 = vpack.c.b16 %v341, %v340
    %v397 = vpack.c.b16 %v343, %v342
    %v398 = vpack.c.b16 %v345, %v344
    %v399 = vpack.c.b16 %v347, %v346
    %v400 = vpack.c.b16 %v349, %v348
    %v401 = vpack.c.b16 %v351, %v350
    %v402 = vpack.c.b16 %v353, %v352
    %vm452 = vcmask 130048
    %v454 = vsel %vm452, %v52, 0
    %456 = vmatprep.subr.bf16.mxu0 0
    %457 = vmatpush1.bf16.msra.mxu0 %v354
    %458 = vmatprep.subr.bf16.mxu0 0
    %459 = vmatpush1.bf16.msra.mxu0 %v355
    %460 = vmatprep.subr.bf16.mxu0 0
    %461 = vmatpush1.bf16.msra.mxu0 %v356
    %462 = vmatprep.subr.bf16.mxu0 0
    %463 = vmatpush1.bf16.msra.mxu0 %v357
    %464 = vmatprep.subr.bf16.mxu0 0
    %465 = vmatpush1.bf16.msra.mxu0 %v358
    %466 = vmatprep.subr.bf16.mxu0 0
    %467 = vmatpush1.bf16.msra.mxu0 %v359
    %468 = vmatprep.subr.bf16.mxu0 0
    %469 = vmatpush1.bf16.msra.mxu0 %v360
    %470 = vmatprep.subr.bf16.mxu0 0
    %471 = vmatpush1.bf16.msra.mxu0 %v361
    %472 = vmatprep.subr.bf16.mxu0 0
    %473 = vmatpush1.bf16.msra.mxu0 %v362
    %474 = vmatprep.subr.bf16.mxu0 0
    %475 = vmatpush1.bf16.msra.mxu0 %v363
    %476 = vmatprep.subr.bf16.mxu0 0
    %477 = vmatpush1.bf16.msra.mxu0 %v364
    %478 = vmatprep.subr.bf16.mxu0 0
    %479 = vmatpush1.bf16.msra.mxu0 %v365
    %480 = vmatprep.subr.bf16.mxu0 0
    %481 = vmatpush1.bf16.msra.mxu0 %v366
    %482 = vmatprep.subr.bf16.mxu0 0
    %483 = vmatpush1.bf16.msra.mxu0 %v367
    %484 = vmatprep.subr.bf16.mxu0 0
    %485 = vmatpush1.bf16.msra.mxu0 %v368
    %486 = vmatprep.subr.bf16.mxu0 0
    %487 = vmatpush1.bf16.msra.mxu0 %v369
    %488 = vmatprep.mubr.bf16.mxu0 %v47
    %489 = vmatmul.mubr.bf16.gmra.mrb[0].mxu0 %v46
    %v490 = vpop.f32.mrb[0].mxu0
    %v491 = vadd.f32 %v156, %v490
    %v492 = vpop.f32.mrb[0].mxu0
    %v493 = vpop.f32.mrb[0].mxu0
    %v494 = vpop.f32.mrb[0].mxu0
    %495 = vdwg.mxu0
    %496 = vmatprep.subr.bf16.mxu0 0
    %497 = vmatpush1.bf16.msra.mxu0 %v370
    %498 = vmatprep.subr.bf16.mxu0 0
    %499 = vmatpush1.bf16.msra.mxu0 %v371
    %500 = vmatprep.subr.bf16.mxu0 0
    %501 = vmatpush1.bf16.msra.mxu0 %v372
    %502 = vmatprep.subr.bf16.mxu0 0
    %503 = vmatpush1.bf16.msra.mxu0 %v373
    %504 = vmatprep.subr.bf16.mxu0 0
    %505 = vmatpush1.bf16.msra.mxu0 %v374
    %506 = vmatprep.subr.bf16.mxu0 0
    %507 = vmatpush1.bf16.msra.mxu0 %v375
    %508 = vmatprep.subr.bf16.mxu0 0
    %509 = vmatpush1.bf16.msra.mxu0 %v376
    %510 = vmatprep.subr.bf16.mxu0 0
    %511 = vmatpush1.bf16.msra.mxu0 %v377
    %512 = vmatprep.subr.bf16.mxu0 0
    %513 = vmatpush1.bf16.msra.mxu0 %v378
    %514 = vmatprep.subr.bf16.mxu0 0
    %515 = vmatpush1.bf16.msra.mxu0 %v379
    %516 = vmatprep.subr.bf16.mxu0 0
    %517 = vmatpush1.bf16.msra.mxu0 %v380
    %518 = vmatprep.subr.bf16.mxu0 0
    %519 = vmatpush1.bf16.msra.mxu0 %v381
    %520 = vmatprep.subr.bf16.mxu0 0
    %521 = vmatpush1.bf16.msra.mxu0 %v382
    %522 = vmatprep.subr.bf16.mxu0 0
    %523 = vmatpush1.bf16.msra.mxu0 %v383
    %524 = vmatprep.subr.bf16.mxu0 0
    %525 = vmatpush1.bf16.msra.mxu0 %v384
    %526 = vmatprep.subr.bf16.mxu0 0
    %527 = vmatpush1.bf16.msra.mxu0 %v385
    %528 = vmatprep.mubr.bf16.mxu0 %v49
    %529 = vmatmul.mubr.bf16.gmra.mrb[0].mxu0 %v48
    %v530 = vpop.f32.mrb[0].mxu0
    %v531 = vadd.f32 %v491, %v530
    %v532 = vpop.f32.mrb[0].mxu0
    %v533 = vpop.f32.mrb[0].mxu0
    %v534 = vpop.f32.mrb[0].mxu0
    %535 = vdwg.mxu0
    %536 = vmatprep.subr.bf16.mxu0 0
    %537 = vmatpush1.bf16.msra.mxu0 %v386
    %538 = vmatprep.subr.bf16.mxu0 0
    %539 = vmatpush1.bf16.msra.mxu0 %v387
    %540 = vmatprep.subr.bf16.mxu0 0
    %541 = vmatpush1.bf16.msra.mxu0 %v388
    %542 = vmatprep.subr.bf16.mxu0 0
    %543 = vmatpush1.bf16.msra.mxu0 %v389
    %544 = vmatprep.subr.bf16.mxu0 0
    %545 = vmatpush1.bf16.msra.mxu0 %v390
    %546 = vmatprep.subr.bf16.mxu0 0
    %547 = vmatpush1.bf16.msra.mxu0 %v391
    %548 = vmatprep.subr.bf16.mxu0 0
    %549 = vmatpush1.bf16.msra.mxu0 %v392
    %550 = vmatprep.subr.bf16.mxu0 0
    %551 = vmatpush1.bf16.msra.mxu0 %v393
    %552 = vmatprep.subr.bf16.mxu0 0
    %553 = vmatpush1.bf16.msra.mxu0 %v394
    %554 = vmatprep.subr.bf16.mxu0 0
    %555 = vmatpush1.bf16.msra.mxu0 %v395
    %556 = vmatprep.subr.bf16.mxu0 0
    %557 = vmatpush1.bf16.msra.mxu0 %v396
    %558 = vmatprep.subr.bf16.mxu0 0
    %559 = vmatpush1.bf16.msra.mxu0 %v397
    %560 = vmatprep.subr.bf16.mxu0 0
    %561 = vmatpush1.bf16.msra.mxu0 %v398
    %562 = vmatprep.subr.bf16.mxu0 0
    %563 = vmatpush1.bf16.msra.mxu0 %v399
    %564 = vmatprep.subr.bf16.mxu0 0
    %565 = vmatpush1.bf16.msra.mxu0 %v400
    %566 = vmatprep.subr.bf16.mxu0 0
    %567 = vmatpush1.bf16.msra.mxu0 %v401
    %568 = vmatprep.mubr.bf16.mxu0 %v51
    %569 = vmatmul.mubr.bf16.gmra.mrb[0].mxu0 %v50
    %v570 = vpop.f32.mrb[0].mxu0
    %v571 = vadd.f32 %v531, %v570
    %v572 = vpop.f32.mrb[0].mxu0
    %v573 = vpop.f32.mrb[0].mxu0
    %v574 = vpop.f32.mrb[0].mxu0
    %575 = vdwg.mxu0
    %576 = vmatprep.subr.bf16.mxu0 0
    %577 = vmatpush1.bf16.msra.mxu0 %v402
    %578 = vmatprep.subr.bf16.mxu0 0
    %579 = vmatpush1.bf16.msra.mxu0 0
    %580 = vmatprep.subr.bf16.mxu0 0
    %581 = vmatpush1.bf16.msra.mxu0 0
    %582 = vmatprep.subr.bf16.mxu0 0
    %583 = vmatpush1.bf16.msra.mxu0 0
    %584 = vmatprep.subr.bf16.mxu0 0
    %585 = vmatpush1.bf16.msra.mxu0 0
    %586 = vmatprep.subr.bf16.mxu0 0
    %587 = vmatpush1.bf16.msra.mxu0 0
    %588 = vmatprep.subr.bf16.mxu0 0
    %589 = vmatpush1.bf16.msra.mxu0 0
    %590 = vmatprep.subr.bf16.mxu0 0
    %591 = vmatpush1.bf16.msra.mxu0 0
    %592 = vmatprep.subr.bf16.mxu0 0
    %593 = vmatpush1.bf16.msra.mxu0 0
    %594 = vmatprep.subr.bf16.mxu0 0
    %595 = vmatpush1.bf16.msra.mxu0 0
    %596 = vmatprep.subr.bf16.mxu0 0
    %597 = vmatpush1.bf16.msra.mxu0 0
    %598 = vmatprep.subr.bf16.mxu0 0
    %599 = vmatpush1.bf16.msra.mxu0 0
    %600 = vmatprep.subr.bf16.mxu0 0
    %601 = vmatpush1.bf16.msra.mxu0 0
    %602 = vmatprep.subr.bf16.mxu0 0
    %603 = vmatpush1.bf16.msra.mxu0 0
    %604 = vmatprep.subr.bf16.mxu0 0
    %605 = vmatpush1.bf16.msra.mxu0 0
    %606 = vmatprep.subr.bf16.mxu0 0
    %607 = vmatpush1.bf16.msra.mxu0 0
    %608 = vmatprep.mubr.bf16.mxu0 0
    %609 = vmatmul.mubr.bf16.gmra.mrb[0].mxu0 %v454
    %v610 = vpop.f32.mrb[0].mxu0
    %v611 = vadd.f32 %v571, %v610
    %v612 = vpop.f32.mrb[0].mxu0
    %v613 = vpop.f32.mrb[0].mxu0
    %v614 = vpop.f32.mrb[0].mxu0
    %615 = vdwg.mxu0
    %v616 = vtanh.pop %v611
    %v617 = vpack.c.bf16 %v616, %v616
    %v618 = vld [vmem:[%s2] sm:$0xf]
    %v619 = vld [vmem:[%s2 + $0x4] sm:$0xf]
    %v620 = vld [vmem:[%s2 + $0x8] sm:$0xf]
    %v621 = vld [vmem:[%s2 + $0xc] sm:$0xf]
    %v622 = vld [vmem:[%s2 + $0x10] sm:$0xf]
    %v623 = vld [vmem:[%s2 + $0x14] sm:$0xf]
    %v624 = vld [vmem:[%s2 + $0x18] sm:$0xf]
    %v625 = vld [vmem:[%s2 + $0x1c] sm:$0xf]
    %v626 = vld [vmem:[%s2 + $0x20] sm:$0xf]
    %v627 = vld [vmem:[%s2 + $0x24] sm:$0xf]
    %v628 = vld [vmem:[%s2 + $0x28] sm:$0xf]
    %v629 = vld [vmem:[%s2 + $0x2c] sm:$0xf]
    %v630 = vld [vmem:[%s2 + $0x30] sm:$0xf]
    %v631 = vld [vmem:[%s2 + $0x34] sm:$0xf]
    %v632 = vld [vmem:[%s2 + $0x38] sm:$0xf]
    %v633 = vld [vmem:[%s2 + $0x3c] sm:$0xf]
    %v634 = vld [vmem:[%s9 + $0x1] sm:$0x1]
    %v636 = vlaneseq
    %v637 = vshrl.u32 %v636, 7
    %v638 = vsub.s32 0, %v637
    %v639 = vrot.slane %v634, %v638
    %v657 = vunpack.c.l.b16 %v618
    %v658 = vunpack.c.l.b16 %v619
    %v659 = vunpack.c.l.b16 %v620
    %v660 = vunpack.c.l.b16 %v621
    %v661 = vunpack.c.l.b16 %v622
    %v662 = vunpack.c.l.b16 %v623
    %v663 = vunpack.c.l.b16 %v624
    %v664 = vunpack.c.l.b16 %v625
    %v665 = vunpack.c.l.b16 %v626
    %v666 = vunpack.c.l.b16 %v627
    %v667 = vunpack.c.l.b16 %v628
    %v668 = vunpack.c.l.b16 %v629
    %v669 = vunpack.c.l.b16 %v630
    %v670 = vunpack.c.l.b16 %v631
    %v671 = vunpack.c.l.b16 %v632
    %v672 = vunpack.c.l.b16 %v633
    %v673 = vpack.c.b16 %v658, %v657
    %v674 = vpack.c.b16 %v660, %v659
    %v675 = vpack.c.b16 %v662, %v661
    %v676 = vpack.c.b16 %v664, %v663
    %v677 = vpack.c.b16 %v666, %v665
    %v678 = vpack.c.b16 %v668, %v667
    %v679 = vpack.c.b16 %v670, %v669
    %v680 = vpack.c.b16 %v672, %v671
    %689 = vmatprep.subr.bf16.mxu0 0
    %690 = vmatpush1.bf16.msra.mxu0 %v673
    %691 = vmatprep.subr.bf16.mxu0 0
    %692 = vmatpush1.bf16.msra.mxu0 %v674
    %693 = vmatprep.subr.bf16.mxu0 0
    %694 = vmatpush1.bf16.msra.mxu0 %v675
    %695 = vmatprep.subr.bf16.mxu0 0
    %696 = vmatpush1.bf16.msra.mxu0 %v676
    %697 = vmatprep.subr.bf16.mxu0 0
    %698 = vmatpush1.bf16.msra.mxu0 %v677
    %699 = vmatprep.subr.bf16.mxu0 0
    %700 = vmatpush1.bf16.msra.mxu0 %v678
    %701 = vmatprep.subr.bf16.mxu0 0
    %702 = vmatpush1.bf16.msra.mxu0 %v679
    %703 = vmatprep.subr.bf16.mxu0 0
    %704 = vmatpush1.bf16.msra.mxu0 %v680
    %705 = vmatprep.subr.bf16.mxu0 0
    %706 = vmatpush1.bf16.msra.mxu0 0
    %707 = vmatprep.subr.bf16.mxu0 0
    %708 = vmatpush1.bf16.msra.mxu0 0
    %709 = vmatprep.subr.bf16.mxu0 0
    %710 = vmatpush1.bf16.msra.mxu0 0
    %711 = vmatprep.subr.bf16.mxu0 0
    %712 = vmatpush1.bf16.msra.mxu0 0
    %713 = vmatprep.subr.bf16.mxu0 0
    %714 = vmatpush1.bf16.msra.mxu0 0
    %715 = vmatprep.subr.bf16.mxu0 0
    %716 = vmatpush1.bf16.msra.mxu0 0
    %717 = vmatprep.subr.bf16.mxu0 0
    %718 = vmatpush1.bf16.msra.mxu0 0
    %719 = vmatprep.subr.bf16.mxu0 0
    %720 = vmatpush1.bf16.msra.mxu0 0
    %721 = vmatprep.mubr.bf16.mxu0 0
    %722 = vmatmul.mubr.bf16.gmra.mrb[0].mxu0 %v617
    %v723 = vpop.f32.mrb[0].mxu0
    %v724 = vadd.f32 %v639, %v723
    %v725 = vpop.f32.mrb[0].mxu0
    %v726 = vpop.f32.mrb[0].mxu0
    %v727 = vpop.f32.mrb[0].mxu0
    %728 = vdwg.mxu0
    %v729 = vtanh.pop %v724
    %v730 = vpack.c.bf16 %v729, %v729
    %v731 = vld [vmem:[%s3] sm:$0xf]
    %v732 = vld [vmem:[%s3 + $0x4] sm:$0xf]
    %v733 = vld [vmem:[%s3 + $0x8] sm:$0xf]
    %v734 = vld [vmem:[%s3 + $0xc] sm:$0xf]
    %v735 = vld [vmem:[%s3 + $0x10] sm:$0xf]
    %v736 = vld [vmem:[%s3 + $0x14] sm:$0xf]
    %v737 = vld [vmem:[%s3 + $0x18] sm:$0xf]
    %v738 = vld [vmem:[%s3 + $0x1c] sm:$0xf]
    %v739 = vld [vmem:[%s3 + $0x20] sm:$0xf]
    %v740 = vld [vmem:[%s3 + $0x24] sm:$0xf]
    %v741 = vld [vmem:[%s3 + $0x28] sm:$0xf]
    %v742 = vld [vmem:[%s3 + $0x2c] sm:$0xf]
    %v743 = vld [vmem:[%s3 + $0x30] sm:$0xf]
    %v744 = vld [vmem:[%s3 + $0x34] sm:$0xf]
    %v745 = vld [vmem:[%s3 + $0x38] sm:$0xf]
    %v746 = vld [vmem:[%s3 + $0x3c] sm:$0xf]
    %v747 = vld [vmem:[%s9 + $0x2] sm:$0x1]
    %v749 = vlaneseq
    %v750 = vshrl.u32 %v749, 7
    %v751 = vsub.s32 0, %v750
    %v752 = vrot.slane %v747, %v751
    %v770 = vunpack.c.l.b16 %v731
    %v771 = vunpack.c.l.b16 %v732
    %v772 = vunpack.c.l.b16 %v733
    %v773 = vunpack.c.l.b16 %v734
    %v774 = vunpack.c.l.b16 %v735
    %v775 = vunpack.c.l.b16 %v736
    %v776 = vunpack.c.l.b16 %v737
    %v777 = vunpack.c.l.b16 %v738
    %v778 = vunpack.c.l.b16 %v739
    %v779 = vunpack.c.l.b16 %v740
    %v780 = vunpack.c.l.b16 %v741
    %v781 = vunpack.c.l.b16 %v742
    %v782 = vunpack.c.l.b16 %v743
    %v783 = vunpack.c.l.b16 %v744
    %v784 = vunpack.c.l.b16 %v745
    %v785 = vunpack.c.l.b16 %v746
    %v786 = vpack.c.b16 %v771, %v770
    %v787 = vpack.c.b16 %v773, %v772
    %v788 = vpack.c.b16 %v775, %v774
    %v789 = vpack.c.b16 %v777, %v776
    %v790 = vpack.c.b16 %v779, %v778
    %v791 = vpack.c.b16 %v781, %v780
    %v792 = vpack.c.b16 %v783, %v782
    %v793 = vpack.c.b16 %v785, %v784
    %802 = vmatprep.subr.bf16.mxu0 0
    %803 = vmatpush1.bf16.msra.mxu0 %v786
    %804 = vmatprep.subr.bf16.mxu0 0
    %805 = vmatpush1.bf16.msra.mxu0 %v787
    %806 = vmatprep.subr.bf16.mxu0 0
    %807 = vmatpush1.bf16.msra.mxu0 %v788
    %808 = vmatprep.subr.bf16.mxu0 0
    %809 = vmatpush1.bf16.msra.mxu0 %v789
    %810 = vmatprep.subr.bf16.mxu0 0
    %811 = vmatpush1.bf16.msra.mxu0 %v790
    %812 = vmatprep.subr.bf16.mxu0 0
    %813 = vmatpush1.bf16.msra.mxu0 %v791
    %814 = vmatprep.subr.bf16.mxu0 0
    %815 = vmatpush1.bf16.msra.mxu0 %v792
    %816 = vmatprep.subr.bf16.mxu0 0
    %817 = vmatpush1.bf16.msra.mxu0 %v793
    %818 = vmatprep.subr.bf16.mxu0 0
    %819 = vmatpush1.bf16.msra.mxu0 0
    %820 = vmatprep.subr.bf16.mxu0 0
    %821 = vmatpush1.bf16.msra.mxu0 0
    %822 = vmatprep.subr.bf16.mxu0 0
    %823 = vmatpush1.bf16.msra.mxu0 0
    %824 = vmatprep.subr.bf16.mxu0 0
    %825 = vmatpush1.bf16.msra.mxu0 0
    %826 = vmatprep.subr.bf16.mxu0 0
    %827 = vmatpush1.bf16.msra.mxu0 0
    %828 = vmatprep.subr.bf16.mxu0 0
    %829 = vmatpush1.bf16.msra.mxu0 0
    %830 = vmatprep.subr.bf16.mxu0 0
    %831 = vmatpush1.bf16.msra.mxu0 0
    %832 = vmatprep.subr.bf16.mxu0 0
    %833 = vmatpush1.bf16.msra.mxu0 0
    %834 = vmatprep.mubr.bf16.mxu0 0
    %835 = vmatmul.mubr.bf16.gmra.mrb[0].mxu0 %v730
    %v836 = vpop.f32.mrb[0].mxu0
    %v837 = vadd.f32 %v752, %v836
    %v838 = vpop.f32.mrb[0].mxu0
    %v839 = vpop.f32.mrb[0].mxu0
    %v840 = vpop.f32.mrb[0].mxu0
    %841 = vdwg.mxu0
    %v842 = vtanh.pop %v837
    %v843 = vpack.c.bf16 %v842, %v842
    %v844 = vld [vmem:[%s4] sm:$0xf]
    %v845 = vld [vmem:[%s4 + $0x4] sm:$0xf]
    %v846 = vld [vmem:[%s4 + $0x8] sm:$0xf]
    %v847 = vld [vmem:[%s4 + $0xc] sm:$0xf]
    %v848 = vld [vmem:[%s4 + $0x10] sm:$0xf]
    %v849 = vld [vmem:[%s4 + $0x14] sm:$0xf]
    %v850 = vld [vmem:[%s4 + $0x18] sm:$0xf]
    %v851 = vld [vmem:[%s4 + $0x1c] sm:$0xf]
    %v852 = vld [vmem:[%s4 + $0x20] sm:$0xf]
    %v853 = vld [vmem:[%s4 + $0x24] sm:$0xf]
    %v854 = vld [vmem:[%s4 + $0x28] sm:$0xf]
    %v855 = vld [vmem:[%s4 + $0x2c] sm:$0xf]
    %v856 = vld [vmem:[%s4 + $0x30] sm:$0xf]
    %v857 = vld [vmem:[%s4 + $0x34] sm:$0xf]
    %v858 = vld [vmem:[%s4 + $0x38] sm:$0xf]
    %v859 = vld [vmem:[%s4 + $0x3c] sm:$0xf]
    %v860 = vld [vmem:[%s9 + $0x3] sm:$0x1]
    %v862 = vlaneseq
    %v863 = vshrl.u32 %v862, 7
    %v864 = vsub.s32 0, %v863
    %v865 = vrot.slane %v860, %v864
    %v883 = vunpack.c.l.b16 %v844
    %v884 = vunpack.c.l.b16 %v845
    %v885 = vunpack.c.l.b16 %v846
    %v886 = vunpack.c.l.b16 %v847
    %v887 = vunpack.c.l.b16 %v848
    %v888 = vunpack.c.l.b16 %v849
    %v889 = vunpack.c.l.b16 %v850
    %v890 = vunpack.c.l.b16 %v851
    %v891 = vunpack.c.l.b16 %v852
    %v892 = vunpack.c.l.b16 %v853
    %v893 = vunpack.c.l.b16 %v854
    %v894 = vunpack.c.l.b16 %v855
    %v895 = vunpack.c.l.b16 %v856
    %v896 = vunpack.c.l.b16 %v857
    %v897 = vunpack.c.l.b16 %v858
    %v898 = vunpack.c.l.b16 %v859
    %v899 = vpack.c.b16 %v884, %v883
    %v900 = vpack.c.b16 %v886, %v885
    %v901 = vpack.c.b16 %v888, %v887
    %v902 = vpack.c.b16 %v890, %v889
    %v903 = vpack.c.b16 %v892, %v891
    %v904 = vpack.c.b16 %v894, %v893
    %v905 = vpack.c.b16 %v896, %v895
    %v906 = vpack.c.b16 %v898, %v897
    %915 = vmatprep.subr.bf16.mxu0 0
    %916 = vmatpush1.bf16.msra.mxu0 %v899
    %917 = vmatprep.subr.bf16.mxu0 0
    %918 = vmatpush1.bf16.msra.mxu0 %v900
    %919 = vmatprep.subr.bf16.mxu0 0
    %920 = vmatpush1.bf16.msra.mxu0 %v901
    %921 = vmatprep.subr.bf16.mxu0 0
    %922 = vmatpush1.bf16.msra.mxu0 %v902
    %923 = vmatprep.subr.bf16.mxu0 0
    %924 = vmatpush1.bf16.msra.mxu0 %v903
    %925 = vmatprep.subr.bf16.mxu0 0
    %926 = vmatpush1.bf16.msra.mxu0 %v904
    %927 = vmatprep.subr.bf16.mxu0 0
    %928 = vmatpush1.bf16.msra.mxu0 %v905
    %929 = vmatprep.subr.bf16.mxu0 0
    %930 = vmatpush1.bf16.msra.mxu0 %v906
    %931 = vmatprep.subr.bf16.mxu0 0
    %932 = vmatpush1.bf16.msra.mxu0 0
    %933 = vmatprep.subr.bf16.mxu0 0
    %934 = vmatpush1.bf16.msra.mxu0 0
    %935 = vmatprep.subr.bf16.mxu0 0
    %936 = vmatpush1.bf16.msra.mxu0 0
    %937 = vmatprep.subr.bf16.mxu0 0
    %938 = vmatpush1.bf16.msra.mxu0 0
    %939 = vmatprep.subr.bf16.mxu0 0
    %940 = vmatpush1.bf16.msra.mxu0 0
    %941 = vmatprep.subr.bf16.mxu0 0
    %942 = vmatpush1.bf16.msra.mxu0 0
    %943 = vmatprep.subr.bf16.mxu0 0
    %944 = vmatpush1.bf16.msra.mxu0 0
    %945 = vmatprep.subr.bf16.mxu0 0
    %946 = vmatpush1.bf16.msra.mxu0 0
    %947 = vmatprep.mubr.bf16.mxu0 0
    %948 = vmatmul.mubr.bf16.gmra.mrb[0].mxu0 %v843
    %v949 = vpop.f32.mrb[0].mxu0
    %v950 = vadd.f32 %v865, %v949
    %v951 = vpop.f32.mrb[0].mxu0
    %v952 = vpop.f32.mrb[0].mxu0
    %v953 = vpop.f32.mrb[0].mxu0
    %954 = vdwg.mxu0
    %vm955 = vcmask 23552
    %956 = vst.msk [vmem:[%s10] sm:$0xff] %vm955, %v950
    %v957 = vpack.c.bf16 %v950, %v950
    %v958 = vld [vmem:[%s5] sm:$0xf]
    %v959 = vld [vmem:[%s5 + $0x4] sm:$0xf]
    %v960 = vld [vmem:[%s5 + $0x8] sm:$0xf]
    %v961 = vld [vmem:[%s5 + $0xc] sm:$0xf]
    %v962 = vld [vmem:[%s5 + $0x10] sm:$0xf]
    %v963 = vld [vmem:[%s5 + $0x14] sm:$0xf]
    %v964 = vld [vmem:[%s5 + $0x18] sm:$0xf]
    %v965 = vld [vmem:[%s5 + $0x1c] sm:$0xf]
    %v966 = vld [vmem:[%s5 + $0x20] sm:$0xf]
    %v967 = vld [vmem:[%s5 + $0x24] sm:$0xf]
    %v968 = vld [vmem:[%s5 + $0x28] sm:$0xf]
    %v969 = vld [vmem:[%s5 + $0x2c] sm:$0xf]
    %v970 = vld [vmem:[%s5 + $0x30] sm:$0xf]
    %v971 = vld [vmem:[%s5 + $0x34] sm:$0xf]
    %v972 = vld [vmem:[%s5 + $0x38] sm:$0xf]
    %v973 = vld [vmem:[%s5 + $0x3c] sm:$0xf]
    %v974 = vld [vmem:[%s9 + $0x4] sm:$0x1]
    %v976 = vlaneseq
    %v977 = vshrl.u32 %v976, 7
    %v978 = vsub.s32 0, %v977
    %v979 = vrot.slane %v974, %v978
    %v997 = vunpack.c.l.b16 %v958
    %v998 = vunpack.c.l.b16 %v959
    %v999 = vunpack.c.l.b16 %v960
    %v1000 = vunpack.c.l.b16 %v961
    %v1001 = vunpack.c.l.b16 %v962
    %v1002 = vunpack.c.l.b16 %v963
    %v1003 = vunpack.c.l.b16 %v964
    %v1004 = vunpack.c.l.b16 %v965
    %v1005 = vunpack.c.l.b16 %v966
    %v1006 = vunpack.c.l.b16 %v967
    %v1007 = vunpack.c.l.b16 %v968
    %v1008 = vunpack.c.l.b16 %v969
    %v1009 = vunpack.c.l.b16 %v970
    %v1010 = vunpack.c.l.b16 %v971
    %v1011 = vunpack.c.l.b16 %v972
    %v1012 = vunpack.c.l.b16 %v973
    %v1013 = vpack.c.b16 %v998, %v997
    %v1014 = vpack.c.b16 %v1000, %v999
    %v1015 = vpack.c.b16 %v1002, %v1001
    %v1016 = vpack.c.b16 %v1004, %v1003
    %v1017 = vpack.c.b16 %v1006, %v1005
    %v1018 = vpack.c.b16 %v1008, %v1007
    %v1019 = vpack.c.b16 %v1010, %v1009
    %v1020 = vpack.c.b16 %v1012, %v1011
    %1029 = vmatprep.subr.bf16.mxu0 0
    %1030 = vmatpush1.bf16.msra.mxu0 %v1013
    %1031 = vmatprep.subr.bf16.mxu0 0
    %1032 = vmatpush1.bf16.msra.mxu0 %v1014
    %1033 = vmatprep.subr.bf16.mxu0 0
    %1034 = vmatpush1.bf16.msra.mxu0 %v1015
    %1035 = vmatprep.subr.bf16.mxu0 0
    %1036 = vmatpush1.bf16.msra.mxu0 %v1016
    %1037 = vmatprep.subr.bf16.mxu0 0
    %1038 = vmatpush1.bf16.msra.mxu0 %v1017
    %1039 = vmatprep.subr.bf16.mxu0 0
    %1040 = vmatpush1.bf16.msra.mxu0 %v1018
    %1041 = vmatprep.subr.bf16.mxu0 0
    %1042 = vmatpush1.bf16.msra.mxu0 %v1019
    %1043 = vmatprep.subr.bf16.mxu0 0
    %1044 = vmatpush1.bf16.msra.mxu0 %v1020
    %1045 = vmatprep.subr.bf16.mxu0 0
    %1046 = vmatpush1.bf16.msra.mxu0 0
    %1047 = vmatprep.subr.bf16.mxu0 0
    %1048 = vmatpush1.bf16.msra.mxu0 0
    %1049 = vmatprep.subr.bf16.mxu0 0
    %1050 = vmatpush1.bf16.msra.mxu0 0
    %1051 = vmatprep.subr.bf16.mxu0 0
    %1052 = vmatpush1.bf16.msra.mxu0 0
    %1053 = vmatprep.subr.bf16.mxu0 0
    %1054 = vmatpush1.bf16.msra.mxu0 0
    %1055 = vmatprep.subr.bf16.mxu0 0
    %1056 = vmatpush1.bf16.msra.mxu0 0
    %1057 = vmatprep.subr.bf16.mxu0 0
    %1058 = vmatpush1.bf16.msra.mxu0 0
    %1059 = vmatprep.subr.bf16.mxu0 0
    %1060 = vmatpush1.bf16.msra.mxu0 0
    %1061 = vmatprep.mubr.bf16.mxu0 0
    %1062 = vmatmul.mubr.bf16.gmra.mrb[0].mxu0 %v957
    %v1063 = vpop.f32.mrb[0].mxu0
    %v1064 = vadd.f32 %v979, %v1063
    %v1065 = vpop.f32.mrb[0].mxu0
    %v1066 = vpop.f32.mrb[0].mxu0
    %v1067 = vpop.f32.mrb[0].mxu0
    %1068 = vdwg.mxu0
    %v1069 = vtanh.pop %v1064
    %v1070 = vpack.c.bf16 %v1069, %v1069
    %v1071 = vld [vmem:[%s6] sm:$0xf]
    %v1072 = vld [vmem:[%s6 + $0x4] sm:$0xf]
    %v1073 = vld [vmem:[%s6 + $0x8] sm:$0xf]
    %v1074 = vld [vmem:[%s6 + $0xc] sm:$0xf]
    %v1075 = vld [vmem:[%s6 + $0x10] sm:$0xf]
    %v1076 = vld [vmem:[%s6 + $0x14] sm:$0xf]
    %v1077 = vld [vmem:[%s6 + $0x18] sm:$0xf]
    %v1078 = vld [vmem:[%s6 + $0x1c] sm:$0xf]
    %v1079 = vld [vmem:[%s6 + $0x20] sm:$0xf]
    %v1080 = vld [vmem:[%s6 + $0x24] sm:$0xf]
    %v1081 = vld [vmem:[%s6 + $0x28] sm:$0xf]
    %v1082 = vld [vmem:[%s6 + $0x2c] sm:$0xf]
    %v1083 = vld [vmem:[%s6 + $0x30] sm:$0xf]
    %v1084 = vld [vmem:[%s6 + $0x34] sm:$0xf]
    %v1085 = vld [vmem:[%s6 + $0x38] sm:$0xf]
    %v1086 = vld [vmem:[%s6 + $0x3c] sm:$0xf]
    %v1087 = vld [vmem:[%s9 + $0x5] sm:$0x1]
    %v1089 = vlaneseq
    %v1090 = vshrl.u32 %v1089, 7
    %v1091 = vsub.s32 0, %v1090
    %v1092 = vrot.slane %v1087, %v1091
    %v1110 = vunpack.c.l.b16 %v1071
    %v1111 = vunpack.c.l.b16 %v1072
    %v1112 = vunpack.c.l.b16 %v1073
    %v1113 = vunpack.c.l.b16 %v1074
    %v1114 = vunpack.c.l.b16 %v1075
    %v1115 = vunpack.c.l.b16 %v1076
    %v1116 = vunpack.c.l.b16 %v1077
    %v1117 = vunpack.c.l.b16 %v1078
    %v1118 = vunpack.c.l.b16 %v1079
    %v1119 = vunpack.c.l.b16 %v1080
    %v1120 = vunpack.c.l.b16 %v1081
    %v1121 = vunpack.c.l.b16 %v1082
    %v1122 = vunpack.c.l.b16 %v1083
    %v1123 = vunpack.c.l.b16 %v1084
    %v1124 = vunpack.c.l.b16 %v1085
    %v1125 = vunpack.c.l.b16 %v1086
    %v1126 = vpack.c.b16 %v1111, %v1110
    %v1127 = vpack.c.b16 %v1113, %v1112
    %v1128 = vpack.c.b16 %v1115, %v1114
    %v1129 = vpack.c.b16 %v1117, %v1116
    %v1130 = vpack.c.b16 %v1119, %v1118
    %v1131 = vpack.c.b16 %v1121, %v1120
    %v1132 = vpack.c.b16 %v1123, %v1122
    %v1133 = vpack.c.b16 %v1125, %v1124
    %1142 = vmatprep.subr.bf16.mxu0 0
    %1143 = vmatpush1.bf16.msra.mxu0 %v1126
    %1144 = vmatprep.subr.bf16.mxu0 0
    %1145 = vmatpush1.bf16.msra.mxu0 %v1127
    %1146 = vmatprep.subr.bf16.mxu0 0
    %1147 = vmatpush1.bf16.msra.mxu0 %v1128
    %1148 = vmatprep.subr.bf16.mxu0 0
    %1149 = vmatpush1.bf16.msra.mxu0 %v1129
    %1150 = vmatprep.subr.bf16.mxu0 0
    %1151 = vmatpush1.bf16.msra.mxu0 %v1130
    %1152 = vmatprep.subr.bf16.mxu0 0
    %1153 = vmatpush1.bf16.msra.mxu0 %v1131
    %1154 = vmatprep.subr.bf16.mxu0 0
    %1155 = vmatpush1.bf16.msra.mxu0 %v1132
    %1156 = vmatprep.subr.bf16.mxu0 0
    %1157 = vmatpush1.bf16.msra.mxu0 %v1133
    %1158 = vmatprep.subr.bf16.mxu0 0
    %1159 = vmatpush1.bf16.msra.mxu0 0
    %1160 = vmatprep.subr.bf16.mxu0 0
    %1161 = vmatpush1.bf16.msra.mxu0 0
    %1162 = vmatprep.subr.bf16.mxu0 0
    %1163 = vmatpush1.bf16.msra.mxu0 0
    %1164 = vmatprep.subr.bf16.mxu0 0
    %1165 = vmatpush1.bf16.msra.mxu0 0
    %1166 = vmatprep.subr.bf16.mxu0 0
    %1167 = vmatpush1.bf16.msra.mxu0 0
    %1168 = vmatprep.subr.bf16.mxu0 0
    %1169 = vmatpush1.bf16.msra.mxu0 0
    %1170 = vmatprep.subr.bf16.mxu0 0
    %1171 = vmatpush1.bf16.msra.mxu0 0
    %1172 = vmatprep.subr.bf16.mxu0 0
    %1173 = vmatpush1.bf16.msra.mxu0 0
    %1174 = vmatprep.mubr.bf16.mxu0 0
    %1175 = vmatmul.mubr.bf16.gmra.mrb[0].mxu0 %v1070
    %v1176 = vpop.f32.mrb[0].mxu0
    %v1177 = vadd.f32 %v1092, %v1176
    %v1178 = vpop.f32.mrb[0].mxu0
    %v1179 = vpop.f32.mrb[0].mxu0
    %v1180 = vpop.f32.mrb[0].mxu0
    %1181 = vdwg.mxu0
    %v1182 = vtanh.pop %v1177
    %v1183 = vpack.c.bf16 %v1182, %v1182
    %v1184 = vld [vmem:[%s7] sm:$0xf]
    %v1185 = vld [vmem:[%s7 + $0x4] sm:$0xf]
    %v1186 = vld [vmem:[%s7 + $0x8] sm:$0xf]
    %v1187 = vld [vmem:[%s7 + $0xc] sm:$0xf]
    %v1188 = vld [vmem:[%s7 + $0x10] sm:$0xf]
    %v1189 = vld [vmem:[%s7 + $0x14] sm:$0xf]
    %v1190 = vld [vmem:[%s7 + $0x18] sm:$0xf]
    %v1191 = vld [vmem:[%s7 + $0x1c] sm:$0xf]
    %v1192 = vld [vmem:[%s7 + $0x20] sm:$0xf]
    %v1193 = vld [vmem:[%s7 + $0x24] sm:$0xf]
    %v1194 = vld [vmem:[%s7 + $0x28] sm:$0xf]
    %v1195 = vld [vmem:[%s7 + $0x2c] sm:$0xf]
    %v1196 = vld [vmem:[%s7 + $0x30] sm:$0xf]
    %v1197 = vld [vmem:[%s7 + $0x34] sm:$0xf]
    %v1198 = vld [vmem:[%s7 + $0x38] sm:$0xf]
    %v1199 = vld [vmem:[%s7 + $0x3c] sm:$0xf]
    %v1200 = vld [vmem:[%s9 + $0x6] sm:$0x1]
    %v1202 = vlaneseq
    %v1203 = vshrl.u32 %v1202, 7
    %v1204 = vsub.s32 0, %v1203
    %v1205 = vrot.slane %v1200, %v1204
    %v1223 = vunpack.c.l.b16 %v1184
    %v1224 = vunpack.c.l.b16 %v1185
    %v1225 = vunpack.c.l.b16 %v1186
    %v1226 = vunpack.c.l.b16 %v1187
    %v1227 = vunpack.c.l.b16 %v1188
    %v1228 = vunpack.c.l.b16 %v1189
    %v1229 = vunpack.c.l.b16 %v1190
    %v1230 = vunpack.c.l.b16 %v1191
    %v1231 = vunpack.c.l.b16 %v1192
    %v1232 = vunpack.c.l.b16 %v1193
    %v1233 = vunpack.c.l.b16 %v1194
    %v1234 = vunpack.c.l.b16 %v1195
    %v1235 = vunpack.c.l.b16 %v1196
    %v1236 = vunpack.c.l.b16 %v1197
    %v1237 = vunpack.c.l.b16 %v1198
    %v1238 = vunpack.c.l.b16 %v1199
    %v1239 = vpack.c.b16 %v1224, %v1223
    %v1240 = vpack.c.b16 %v1226, %v1225
    %v1241 = vpack.c.b16 %v1228, %v1227
    %v1242 = vpack.c.b16 %v1230, %v1229
    %v1243 = vpack.c.b16 %v1232, %v1231
    %v1244 = vpack.c.b16 %v1234, %v1233
    %v1245 = vpack.c.b16 %v1236, %v1235
    %v1246 = vpack.c.b16 %v1238, %v1237
    %1255 = vmatprep.subr.bf16.mxu0 0
    %1256 = vmatpush1.bf16.msra.mxu0 %v1239
    %1257 = vmatprep.subr.bf16.mxu0 0
    %1258 = vmatpush1.bf16.msra.mxu0 %v1240
    %1259 = vmatprep.subr.bf16.mxu0 0
    %1260 = vmatpush1.bf16.msra.mxu0 %v1241
    %1261 = vmatprep.subr.bf16.mxu0 0
    %1262 = vmatpush1.bf16.msra.mxu0 %v1242
    %1263 = vmatprep.subr.bf16.mxu0 0
    %1264 = vmatpush1.bf16.msra.mxu0 %v1243
    %1265 = vmatprep.subr.bf16.mxu0 0
    %1266 = vmatpush1.bf16.msra.mxu0 %v1244
    %1267 = vmatprep.subr.bf16.mxu0 0
    %1268 = vmatpush1.bf16.msra.mxu0 %v1245
    %1269 = vmatprep.subr.bf16.mxu0 0
    %1270 = vmatpush1.bf16.msra.mxu0 %v1246
    %1271 = vmatprep.subr.bf16.mxu0 0
    %1272 = vmatpush1.bf16.msra.mxu0 0
    %1273 = vmatprep.subr.bf16.mxu0 0
    %1274 = vmatpush1.bf16.msra.mxu0 0
    %1275 = vmatprep.subr.bf16.mxu0 0
    %1276 = vmatpush1.bf16.msra.mxu0 0
    %1277 = vmatprep.subr.bf16.mxu0 0
    %1278 = vmatpush1.bf16.msra.mxu0 0
    %1279 = vmatprep.subr.bf16.mxu0 0
    %1280 = vmatpush1.bf16.msra.mxu0 0
    %1281 = vmatprep.subr.bf16.mxu0 0
    %1282 = vmatpush1.bf16.msra.mxu0 0
    %1283 = vmatprep.subr.bf16.mxu0 0
    %1284 = vmatpush1.bf16.msra.mxu0 0
    %1285 = vmatprep.subr.bf16.mxu0 0
    %1286 = vmatpush1.bf16.msra.mxu0 0
    %1287 = vmatprep.mubr.bf16.mxu0 0
    %1288 = vmatmul.mubr.bf16.gmra.mrb[0].mxu0 %v1183
    %v1289 = vpop.f32.mrb[0].mxu0
    %v1290 = vadd.f32 %v1205, %v1289
    %v1291 = vpop.f32.mrb[0].mxu0
    %v1292 = vpop.f32.mrb[0].mxu0
    %v1293 = vpop.f32.mrb[0].mxu0
    %1294 = vdwg.mxu0
    %v1295 = vtanh.pop %v1290
    %v1296 = vpack.c.bf16 %v1295, %v1295
    %v1297 = vld [vmem:[%s8] sm:$0xff]
    %v1298 = vld [vmem:[%s8 + $0x8] sm:$0xff]
    %v1299 = vld [vmem:[%s8 + $0x10] sm:$0xff]
    %v1300 = vld [vmem:[%s8 + $0x18] sm:$0xf]
    %v1301 = vld [vmem:[%s8 + $0x1c] sm:$0xff]
    %v1302 = vld [vmem:[%s8 + $0x24] sm:$0xff]
    %v1303 = vld [vmem:[%s8 + $0x2c] sm:$0xff]
    %v1304 = vld [vmem:[%s8 + $0x34] sm:$0xf]
    %v1305 = vld [vmem:[%s8 + $0x38] sm:$0xff]
    %v1306 = vld [vmem:[%s8 + $0x40] sm:$0xff]
    %v1307 = vld [vmem:[%s8 + $0x48] sm:$0xff]
    %v1308 = vld [vmem:[%s8 + $0x50] sm:$0xf]
    %v1309 = vld [vmem:[%s8 + $0x54] sm:$0xff]
    %v1310 = vld [vmem:[%s8 + $0x5c] sm:$0xff]
    %v1311 = vld [vmem:[%s8 + $0x64] sm:$0xff]
    %v1312 = vld [vmem:[%s8 + $0x6c] sm:$0xf]
    %v1313 = vld [vmem:[%s8 + $0x70] sm:$0xff]
    %v1314 = vld [vmem:[%s8 + $0x78] sm:$0xff]
    %v1315 = vld [vmem:[%s8 + $0x80] sm:$0xff]
    %v1316 = vld [vmem:[%s8 + $0x88] sm:$0xf]
    %v1317 = vld [vmem:[%s8 + $0x8c] sm:$0xff]
    %v1318 = vld [vmem:[%s8 + $0x94] sm:$0xff]
    %v1319 = vld [vmem:[%s8 + $0x9c] sm:$0xff]
    %v1320 = vld [vmem:[%s8 + $0xa4] sm:$0xf]
    %v1321 = vld [vmem:[%s8 + $0xa8] sm:$0xff]
    %v1322 = vld [vmem:[%s8 + $0xb0] sm:$0xff]
    %v1323 = vld [vmem:[%s8 + $0xb8] sm:$0xff]
    %v1324 = vld [vmem:[%s8 + $0xc0] sm:$0xf]
    %v1325 = vld [vmem:[%s8 + $0xc4] sm:$0xff]
    %v1326 = vld [vmem:[%s8 + $0xcc] sm:$0xff]
    %v1327 = vld [vmem:[%s8 + $0xd4] sm:$0xff]
    %v1328 = vld [vmem:[%s8 + $0xdc] sm:$0xf]
    %v1329 = vld [vmem:[%s8 + $0xe0] sm:$0xff]
    %v1330 = vld [vmem:[%s8 + $0xe8] sm:$0xff]
    %v1331 = vld [vmem:[%s8 + $0xf0] sm:$0xff]
    %v1332 = vld [vmem:[%s8 + $0xf8] sm:$0xf]
    %v1333 = vld [vmem:[%s8 + $0xfc] sm:$0xff]
    %v1334 = vld [vmem:[%s8 + $0x104] sm:$0xff]
    %v1335 = vld [vmem:[%s8 + $0x10c] sm:$0xff]
    %v1336 = vld [vmem:[%s8 + $0x114] sm:$0xf]
    %v1337 = vld [vmem:[%s8 + $0x118] sm:$0xff]
    %v1338 = vld [vmem:[%s8 + $0x120] sm:$0xff]
    %v1339 = vld [vmem:[%s8 + $0x128] sm:$0xff]
    %v1340 = vld [vmem:[%s8 + $0x130] sm:$0xf]
    %v1341 = vld [vmem:[%s8 + $0x134] sm:$0xff]
    %v1342 = vld [vmem:[%s8 + $0x13c] sm:$0xff]
    %v1343 = vld [vmem:[%s8 + $0x144] sm:$0xff]
    %v1344 = vld [vmem:[%s8 + $0x14c] sm:$0xf]
    %v1345 = vld [vmem:[%s8 + $0x150] sm:$0xff]
    %v1346 = vld [vmem:[%s8 + $0x158] sm:$0xff]
    %v1347 = vld [vmem:[%s8 + $0x160] sm:$0xff]
    %v1348 = vld [vmem:[%s8 + $0x168] sm:$0xf]
    %v1349 = vld [vmem:[%s8 + $0x16c] sm:$0xff]
    %v1350 = vld [vmem:[%s8 + $0x174] sm:$0xff]
    %v1351 = vld [vmem:[%s8 + $0x17c] sm:$0xff]
    %v1352 = vld [vmem:[%s8 + $0x184] sm:$0xf]
    %v1353 = vld [vmem:[%s8 + $0x188] sm:$0xff]
    %v1354 = vld [vmem:[%s8 + $0x190] sm:$0xff]
    %v1355 = vld [vmem:[%s8 + $0x198] sm:$0xff]
    %v1356 = vld [vmem:[%s8 + $0x1a0] sm:$0xf]
    %v1357 = vld [vmem:[%s8 + $0x1a4] sm:$0xff]
    %v1358 = vld [vmem:[%s8 + $0x1ac] sm:$0xff]
    %v1359 = vld [vmem:[%s8 + $0x1b4] sm:$0xff]
    %v1360 = vld [vmem:[%s8 + $0x1bc] sm:$0xf]
    %v1361 = vld [vmem:[%s9 + $0x7] sm:$0x7f]
    %v1363 = vlaneseq
    %v1364 = vshrl.u32 %v1363, 7
    %v1365 = vsub.s32 0, %v1364
    %v1366 = vrot.slane %v1361, %v1365
    %v1367 = vlaneseq
    %v1368 = vshrl.u32 %v1367, 7
    %v1369 = vsub.s32 1, %v1368
    %v1370 = vrot.slane %v1361, %v1369
    %v1371 = vlaneseq
    %v1372 = vshrl.u32 %v1371, 7
    %v1373 = vsub.s32 2, %v1372
    %v1374 = vrot.slane %v1361, %v1373
    %v1375 = vlaneseq
    %v1376 = vshrl.u32 %v1375, 7
    %v1377 = vsub.s32 3, %v1376
    %v1378 = vrot.slane %v1361, %v1377
    %v1379 = vlaneseq
    %v1380 = vshrl.u32 %v1379, 7
    %v1381 = vsub.s32 4, %v1380
    %v1382 = vrot.slane %v1361, %v1381
    %v1383 = vlaneseq
    %v1384 = vshrl.u32 %v1383, 7
    %v1385 = vsub.s32 5, %v1384
    %v1386 = vrot.slane %v1361, %v1385
    %v1387 = vlaneseq
    %v1388 = vshrl.u32 %v1387, 7
    %v1389 = vsub.s32 6, %v1388
    %v1390 = vrot.slane %v1361, %v1389
    %v1462 = vunpack.c.l.b16 %v1297
    %v1463 = vunpack.c.h.b16 %v1297
    %v1464 = vunpack.c.l.b16 %v1298
    %v1465 = vunpack.c.h.b16 %v1298
    %v1466 = vunpack.c.l.b16 %v1299
    %v1467 = vunpack.c.h.b16 %v1299
    %v1468 = vunpack.c.l.b16 %v1300
    %v1469 = vunpack.c.l.b16 %v1301
    %v1470 = vunpack.c.h.b16 %v1301
    %v1471 = vunpack.c.l.b16 %v1302
    %v1472 = vunpack.c.h.b16 %v1302
    %v1473 = vunpack.c.l.b16 %v1303
    %v1474 = vunpack.c.h.b16 %v1303
    %v1475 = vunpack.c.l.b16 %v1304
    %v1476 = vunpack.c.l.b16 %v1305
    %v1477 = vunpack.c.h.b16 %v1305
    %v1478 = vunpack.c.l.b16 %v1306
    %v1479 = vunpack.c.h.b16 %v1306
    %v1480 = vunpack.c.l.b16 %v1307
    %v1481 = vunpack.c.h.b16 %v1307
    %v1482 = vunpack.c.l.b16 %v1308
    %v1483 = vunpack.c.l.b16 %v1309
    %v1484 = vunpack.c.h.b16 %v1309
    %v1485 = vunpack.c.l.b16 %v1310
    %v1486 = vunpack.c.h.b16 %v1310
    %v1487 = vunpack.c.l.b16 %v1311
    %v1488 = vunpack.c.h.b16 %v1311
    %v1489 = vunpack.c.l.b16 %v1312
    %v1490 = vunpack.c.l.b16 %v1313
    %v1491 = vunpack.c.h.b16 %v1313
    %v1492 = vunpack.c.l.b16 %v1314
    %v1493 = vunpack.c.h.b16 %v1314
    %v1494 = vunpack.c.l.b16 %v1315
    %v1495 = vunpack.c.h.b16 %v1315
    %v1496 = vunpack.c.l.b16 %v1316
    %v1497 = vunpack.c.l.b16 %v1317
    %v1498 = vunpack.c.h.b16 %v1317
    %v1499 = vunpack.c.l.b16 %v1318
    %v1500 = vunpack.c.h.b16 %v1318
    %v1501 = vunpack.c.l.b16 %v1319
    %v1502 = vunpack.c.h.b16 %v1319
    %v1503 = vunpack.c.l.b16 %v1320
    %v1504 = vunpack.c.l.b16 %v1321
    %v1505 = vunpack.c.h.b16 %v1321
    %v1506 = vunpack.c.l.b16 %v1322
    %v1507 = vunpack.c.h.b16 %v1322
    %v1508 = vunpack.c.l.b16 %v1323
    %v1509 = vunpack.c.h.b16 %v1323
    %v1510 = vunpack.c.l.b16 %v1324
    %v1511 = vunpack.c.l.b16 %v1325
    %v1512 = vunpack.c.h.b16 %v1325
    %v1513 = vunpack.c.l.b16 %v1326
    %v1514 = vunpack.c.h.b16 %v1326
    %v1515 = vunpack.c.l.b16 %v1327
    %v1516 = vunpack.c.h.b16 %v1327
    %v1517 = vunpack.c.l.b16 %v1328
    %v1518 = vunpack.c.l.b16 %v1329
    %v1519 = vunpack.c.h.b16 %v1329
    %v1520 = vunpack.c.l.b16 %v1330
    %v1521 = vunpack.c.h.b16 %v1330
    %v1522 = vunpack.c.l.b16 %v1331
    %v1523 = vunpack.c.h.b16 %v1331
    %v1524 = vunpack.c.l.b16 %v1332
    %v1525 = vunpack.c.l.b16 %v1333
    %v1526 = vunpack.c.h.b16 %v1333
    %v1527 = vunpack.c.l.b16 %v1334
    %v1528 = vunpack.c.h.b16 %v1334
    %v1529 = vunpack.c.l.b16 %v1335
    %v1530 = vunpack.c.h.b16 %v1335
    %v1531 = vunpack.c.l.b16 %v1336
    %v1532 = vunpack.c.l.b16 %v1337
    %v1533 = vunpack.c.h.b16 %v1337
    %v1534 = vunpack.c.l.b16 %v1338
    %v1535 = vunpack.c.h.b16 %v1338
    %v1536 = vunpack.c.l.b16 %v1339
    %v1537 = vunpack.c.h.b16 %v1339
    %v1538 = vunpack.c.l.b16 %v1340
    %v1539 = vunpack.c.l.b16 %v1341
    %v1540 = vunpack.c.h.b16 %v1341
    %v1541 = vunpack.c.l.b16 %v1342
    %v1542 = vunpack.c.h.b16 %v1342
    %v1543 = vunpack.c.l.b16 %v1343
    %v1544 = vunpack.c.h.b16 %v1343
    %v1545 = vunpack.c.l.b16 %v1344
    %v1546 = vunpack.c.l.b16 %v1345
    %v1547 = vunpack.c.h.b16 %v1345
    %v1548 = vunpack.c.l.b16 %v1346
    %v1549 = vunpack.c.h.b16 %v1346
    %v1550 = vunpack.c.l.b16 %v1347
    %v1551 = vunpack.c.h.b16 %v1347
    %v1552 = vunpack.c.l.b16 %v1348
    %v1553 = vunpack.c.l.b16 %v1349
    %v1554 = vunpack.c.h.b16 %v1349
    %v1555 = vunpack.c.l.b16 %v1350
    %v1556 = vunpack.c.h.b16 %v1350
    %v1557 = vunpack.c.l.b16 %v1351
    %v1558 = vunpack.c.h.b16 %v1351
    %v1559 = vunpack.c.l.b16 %v1352
    %v1560 = vunpack.c.l.b16 %v1353
    %v1561 = vunpack.c.h.b16 %v1353
    %v1562 = vunpack.c.l.b16 %v1354
    %v1563 = vunpack.c.h.b16 %v1354
    %v1564 = vunpack.c.l.b16 %v1355
    %v1565 = vunpack.c.h.b16 %v1355
    %v1566 = vunpack.c.l.b16 %v1356
    %v1567 = vunpack.c.l.b16 %v1357
    %v1568 = vunpack.c.h.b16 %v1357
    %v1569 = vunpack.c.l.b16 %v1358
    %v1570 = vunpack.c.h.b16 %v1358
    %v1571 = vunpack.c.l.b16 %v1359
    %v1572 = vunpack.c.h.b16 %v1359
    %v1573 = vunpack.c.l.b16 %v1360
    %v1574 = vpack.c.b16 %v1469, %v1462
    %v1575 = vpack.c.b16 %v1470, %v1463
    %v1576 = vpack.c.b16 %v1471, %v1464
    %v1577 = vpack.c.b16 %v1472, %v1465
    %v1578 = vpack.c.b16 %v1473, %v1466
    %v1579 = vpack.c.b16 %v1474, %v1467
    %v1580 = vpack.c.b16 %v1475, %v1468
    %v1581 = vpack.c.b16 %v1483, %v1476
    %v1582 = vpack.c.b16 %v1484, %v1477
    %v1583 = vpack.c.b16 %v1485, %v1478
    %v1584 = vpack.c.b16 %v1486, %v1479
    %v1585 = vpack.c.b16 %v1487, %v1480
    %v1586 = vpack.c.b16 %v1488, %v1481
    %v1587 = vpack.c.b16 %v1489, %v1482
    %v1588 = vpack.c.b16 %v1497, %v1490
    %v1589 = vpack.c.b16 %v1498, %v1491
    %v1590 = vpack.c.b16 %v1499, %v1492
    %v1591 = vpack.c.b16 %v1500, %v1493
    %v1592 = vpack.c.b16 %v1501, %v1494
    %v1593 = vpack.c.b16 %v1502, %v1495
    %v1594 = vpack.c.b16 %v1503, %v1496
    %v1595 = vpack.c.b16 %v1511, %v1504
    %v1596 = vpack.c.b16 %v1512, %v1505
    %v1597 = vpack.c.b16 %v1513, %v1506
    %v1598 = vpack.c.b16 %v1514, %v1507
    %v1599 = vpack.c.b16 %v1515, %v1508
    %v1600 = vpack.c.b16 %v1516, %v1509
    %v1601 = vpack.c.b16 %v1517, %v1510
    %v1602 = vpack.c.b16 %v1525, %v1518
    %v1603 = vpack.c.b16 %v1526, %v1519
    %v1604 = vpack.c.b16 %v1527, %v1520
    %v1605 = vpack.c.b16 %v1528, %v1521
    %v1606 = vpack.c.b16 %v1529, %v1522
    %v1607 = vpack.c.b16 %v1530, %v1523
    %v1608 = vpack.c.b16 %v1531, %v1524
    %v1609 = vpack.c.b16 %v1539, %v1532
    %v1610 = vpack.c.b16 %v1540, %v1533
    %v1611 = vpack.c.b16 %v1541, %v1534
    %v1612 = vpack.c.b16 %v1542, %v1535
    %v1613 = vpack.c.b16 %v1543, %v1536
    %v1614 = vpack.c.b16 %v1544, %v1537
    %v1615 = vpack.c.b16 %v1545, %v1538
    %v1616 = vpack.c.b16 %v1553, %v1546
    %v1617 = vpack.c.b16 %v1554, %v1547
    %v1618 = vpack.c.b16 %v1555, %v1548
    %v1619 = vpack.c.b16 %v1556, %v1549
    %v1620 = vpack.c.b16 %v1557, %v1550
    %v1621 = vpack.c.b16 %v1558, %v1551
    %v1622 = vpack.c.b16 %v1559, %v1552
    %v1623 = vpack.c.b16 %v1567, %v1560
    %v1624 = vpack.c.b16 %v1568, %v1561
    %v1625 = vpack.c.b16 %v1569, %v1562
    %v1626 = vpack.c.b16 %v1570, %v1563
    %v1627 = vpack.c.b16 %v1571, %v1564
    %v1628 = vpack.c.b16 %v1572, %v1565
    %v1629 = vpack.c.b16 %v1573, %v1566
    %1686 = vmatprep.subr.bf16.mxu0 %v1575
    %1687 = vmatpush1.bf16.msra.mxu0 %v1574
    %1688 = vmatprep.subr.bf16.mxu0 %v1582
    %1689 = vmatpush1.bf16.msra.mxu0 %v1581
    %1690 = vmatprep.subr.bf16.mxu0 %v1589
    %1691 = vmatpush1.bf16.msra.mxu0 %v1588
    %1692 = vmatprep.subr.bf16.mxu0 %v1596
    %1693 = vmatpush1.bf16.msra.mxu0 %v1595
    %1694 = vmatprep.subr.bf16.mxu0 %v1603
    %1695 = vmatpush1.bf16.msra.mxu0 %v1602
    %1696 = vmatprep.subr.bf16.mxu0 %v1610
    %1697 = vmatpush1.bf16.msra.mxu0 %v1609
    %1698 = vmatprep.subr.bf16.mxu0 %v1617
    %1699 = vmatpush1.bf16.msra.mxu0 %v1616
    %1700 = vmatprep.subr.bf16.mxu0 %v1624
    %1701 = vmatpush1.bf16.msra.mxu0 %v1623
    %1702 = vmatprep.subr.bf16.mxu0 0
    %1703 = vmatpush1.bf16.msra.mxu0 0
    %1704 = vmatprep.subr.bf16.mxu0 0
    %1705 = vmatpush1.bf16.msra.mxu0 0
    %1706 = vmatprep.subr.bf16.mxu0 0
    %1707 = vmatpush1.bf16.msra.mxu0 0
    %1708 = vmatprep.subr.bf16.mxu0 0
    %1709 = vmatpush1.bf16.msra.mxu0 0
    %1710 = vmatprep.subr.bf16.mxu0 0
    %1711 = vmatpush1.bf16.msra.mxu0 0
    %1712 = vmatprep.subr.bf16.mxu0 0
    %1713 = vmatpush1.bf16.msra.mxu0 0
    %1714 = vmatprep.subr.bf16.mxu0 0
    %1715 = vmatpush1.bf16.msra.mxu0 0
    %1716 = vmatprep.subr.bf16.mxu0 0
    %1717 = vmatpush1.bf16.msra.mxu0 0
    %1718 = vmatprep.mubr.bf16.mxu0 0
    %1719 = vmatmul.mubr.bf16.gmra.mrb[0].mxu0 %v1296
    %v1720 = vpop.f32.mrb[0].mxu0
    %v1721 = vadd.f32 %v1366, %v1720
    %v1722 = vpop.f32.mrb[0].mxu0
    %v1723 = vadd.f32 %v1370, %v1722
    %v1724 = vpop.f32.mrb[0].mxu0
    %v1725 = vpop.f32.mrb[0].mxu0
    %1726 = vdwg.mxu0
    %1727 = vmatprep.subr.bf16.mxu0 %v1577
    %1728 = vmatpush1.bf16.msra.mxu0 %v1576
    %1729 = vmatprep.subr.bf16.mxu0 %v1584
    %1730 = vmatpush1.bf16.msra.mxu0 %v1583
    %1731 = vmatprep.subr.bf16.mxu0 %v1591
    %1732 = vmatpush1.bf16.msra.mxu0 %v1590
    %1733 = vmatprep.subr.bf16.mxu0 %v1598
    %1734 = vmatpush1.bf16.msra.mxu0 %v1597
    %1735 = vmatprep.subr.bf16.mxu0 %v1605
    %1736 = vmatpush1.bf16.msra.mxu0 %v1604
    %1737 = vmatprep.subr.bf16.mxu0 %v1612
    %1738 = vmatpush1.bf16.msra.mxu0 %v1611
    %1739 = vmatprep.subr.bf16.mxu0 %v1619
    %1740 = vmatpush1.bf16.msra.mxu0 %v1618
    %1741 = vmatprep.subr.bf16.mxu0 %v1626
    %1742 = vmatpush1.bf16.msra.mxu0 %v1625
    %1743 = vmatprep.subr.bf16.mxu0 0
    %1744 = vmatpush1.bf16.msra.mxu0 0
    %1745 = vmatprep.subr.bf16.mxu0 0
    %1746 = vmatpush1.bf16.msra.mxu0 0
    %1747 = vmatprep.subr.bf16.mxu0 0
    %1748 = vmatpush1.bf16.msra.mxu0 0
    %1749 = vmatprep.subr.bf16.mxu0 0
    %1750 = vmatpush1.bf16.msra.mxu0 0
    %1751 = vmatprep.subr.bf16.mxu0 0
    %1752 = vmatpush1.bf16.msra.mxu0 0
    %1753 = vmatprep.subr.bf16.mxu0 0
    %1754 = vmatpush1.bf16.msra.mxu0 0
    %1755 = vmatprep.subr.bf16.mxu0 0
    %1756 = vmatpush1.bf16.msra.mxu0 0
    %1757 = vmatprep.subr.bf16.mxu0 0
    %1758 = vmatpush1.bf16.msra.mxu0 0
    %1759 = vmatprep.mubr.bf16.mxu0 0
    %1760 = vmatmul.mubr.bf16.gmra.mrb[0].mxu0 %v1296
    %v1761 = vpop.f32.mrb[0].mxu0
    %v1762 = vadd.f32 %v1374, %v1761
    %v1763 = vpop.f32.mrb[0].mxu0
    %v1764 = vadd.f32 %v1378, %v1763
    %v1765 = vpop.f32.mrb[0].mxu0
    %v1766 = vpop.f32.mrb[0].mxu0
    %1767 = vdwg.mxu0
    %1768 = vmatprep.subr.bf16.mxu0 %v1579
    %1769 = vmatpush1.bf16.msra.mxu0 %v1578
    %1770 = vmatprep.subr.bf16.mxu0 %v1586
    %1771 = vmatpush1.bf16.msra.mxu0 %v1585
    %1772 = vmatprep.subr.bf16.mxu0 %v1593
    %1773 = vmatpush1.bf16.msra.mxu0 %v1592
    %1774 = vmatprep.subr.bf16.mxu0 %v1600
    %1775 = vmatpush1.bf16.msra.mxu0 %v1599
    %1776 = vmatprep.subr.bf16.mxu0 %v1607
    %1777 = vmatpush1.bf16.msra.mxu0 %v1606
    %1778 = vmatprep.subr.bf16.mxu0 %v1614
    %1779 = vmatpush1.bf16.msra.mxu0 %v1613
    %1780 = vmatprep.subr.bf16.mxu0 %v1621
    %1781 = vmatpush1.bf16.msra.mxu0 %v1620
    %1782 = vmatprep.subr.bf16.mxu0 %v1628
    %1783 = vmatpush1.bf16.msra.mxu0 %v1627
    %1784 = vmatprep.subr.bf16.mxu0 0
    %1785 = vmatpush1.bf16.msra.mxu0 0
    %1786 = vmatprep.subr.bf16.mxu0 0
    %1787 = vmatpush1.bf16.msra.mxu0 0
    %1788 = vmatprep.subr.bf16.mxu0 0
    %1789 = vmatpush1.bf16.msra.mxu0 0
    %1790 = vmatprep.subr.bf16.mxu0 0
    %1791 = vmatpush1.bf16.msra.mxu0 0
    %1792 = vmatprep.subr.bf16.mxu0 0
    %1793 = vmatpush1.bf16.msra.mxu0 0
    %1794 = vmatprep.subr.bf16.mxu0 0
    %1795 = vmatpush1.bf16.msra.mxu0 0
    %1796 = vmatprep.subr.bf16.mxu0 0
    %1797 = vmatpush1.bf16.msra.mxu0 0
    %1798 = vmatprep.subr.bf16.mxu0 0
    %1799 = vmatpush1.bf16.msra.mxu0 0
    %1800 = vmatprep.mubr.bf16.mxu0 0
    %1801 = vmatmul.mubr.bf16.gmra.mrb[0].mxu0 %v1296
    %v1802 = vpop.f32.mrb[0].mxu0
    %v1803 = vadd.f32 %v1382, %v1802
    %v1804 = vpop.f32.mrb[0].mxu0
    %v1805 = vadd.f32 %v1386, %v1804
    %v1806 = vpop.f32.mrb[0].mxu0
    %v1807 = vpop.f32.mrb[0].mxu0
    %1808 = vdwg.mxu0
    %1809 = vmatprep.subr.bf16.mxu0 0
    %1810 = vmatpush1.bf16.msra.mxu0 %v1580
    %1811 = vmatprep.subr.bf16.mxu0 0
    %1812 = vmatpush1.bf16.msra.mxu0 %v1587
    %1813 = vmatprep.subr.bf16.mxu0 0
    %1814 = vmatpush1.bf16.msra.mxu0 %v1594
    %1815 = vmatprep.subr.bf16.mxu0 0
    %1816 = vmatpush1.bf16.msra.mxu0 %v1601
    %1817 = vmatprep.subr.bf16.mxu0 0
    %1818 = vmatpush1.bf16.msra.mxu0 %v1608
    %1819 = vmatprep.subr.bf16.mxu0 0
    %1820 = vmatpush1.bf16.msra.mxu0 %v1615
    %1821 = vmatprep.subr.bf16.mxu0 0
    %1822 = vmatpush1.bf16.msra.mxu0 %v1622
    %1823 = vmatprep.subr.bf16.mxu0 0
    %1824 = vmatpush1.bf16.msra.mxu0 %v1629
    %1825 = vmatprep.subr.bf16.mxu0 0
    %1826 = vmatpush1.bf16.msra.mxu0 0
    %1827 = vmatprep.subr.bf16.mxu0 0
    %1828 = vmatpush1.bf16.msra.mxu0 0
    %1829 = vmatprep.subr.bf16.mxu0 0
    %1830 = vmatpush1.bf16.msra.mxu0 0
    %1831 = vmatprep.subr.bf16.mxu0 0
    %1832 = vmatpush1.bf16.msra.mxu0 0
    %1833 = vmatprep.subr.bf16.mxu0 0
    %1834 = vmatpush1.bf16.msra.mxu0 0
    %1835 = vmatprep.subr.bf16.mxu0 0
    %1836 = vmatpush1.bf16.msra.mxu0 0
    %1837 = vmatprep.subr.bf16.mxu0 0
    %1838 = vmatpush1.bf16.msra.mxu0 0
    %1839 = vmatprep.subr.bf16.mxu0 0
    %1840 = vmatpush1.bf16.msra.mxu0 0
    %1841 = vmatprep.mubr.bf16.mxu0 0
    %1842 = vmatmul.mubr.bf16.gmra.mrb[0].mxu0 %v1296
    %v1843 = vpop.f32.mrb[0].mxu0
    %v1844 = vadd.f32 %v1390, %v1843
    %v1845 = vpop.f32.mrb[0].mxu0
    %v1846 = vpop.f32.mrb[0].mxu0
    %v1847 = vpop.f32.mrb[0].mxu0
    %1848 = vdwg.mxu0
    %v1849 = vxor.u32 %v1721, 2147483648
    %v1850 = vxor.u32 %v1723, 2147483648
    %v1851 = vxor.u32 %v1762, 2147483648
    %v1852 = vxor.u32 %v1764, 2147483648
    %v1853 = vxor.u32 %v1803, 2147483648
    %v1854 = vxor.u32 %v1805, 2147483648
    %v1855 = vxor.u32 %v1844, 2147483648
    %v1856 = vmul.f32 %v1849, 1.442695
    %v1857 = vpow.pop %v1856
    %v1858 = vmul.f32 %v1850, 1.442695
    %v1859 = vpow.pop %v1858
    %v1860 = vmul.f32 %v1851, 1.442695
    %v1861 = vpow.pop %v1860
    %v1862 = vmul.f32 %v1852, 1.442695
    %v1863 = vpow.pop %v1862
    %v1864 = vmul.f32 %v1853, 1.442695
    %v1865 = vpow.pop %v1864
    %v1866 = vmul.f32 %v1854, 1.442695
    %v1867 = vpow.pop %v1866
    %v1868 = vmul.f32 %v1855, 1.442695
    %v1869 = vpow.pop %v1868
    %v1870 = vadd.f32 %v1857, 1.0
    %v1871 = vadd.f32 %v1859, 1.0
    %v1872 = vadd.f32 %v1861, 1.0
    %v1873 = vadd.f32 %v1863, 1.0
    %v1874 = vadd.f32 %v1865, 1.0
    %v1875 = vadd.f32 %v1867, 1.0
    %v1876 = vadd.f32 %v1869, 1.0
    %v1877 = vrcp.pop %v1870
    %v1878 = vmul.f32 1.0, %v1877
    %v1879 = vrcp.pop %v1871
    %v1880 = vmul.f32 1.0, %v1879
    %v1881 = vrcp.pop %v1872
    %v1882 = vmul.f32 1.0, %v1881
    %v1883 = vrcp.pop %v1873
    %v1884 = vmul.f32 1.0, %v1883
    %v1885 = vrcp.pop %v1874
    %v1886 = vmul.f32 1.0, %v1885
    %v1887 = vrcp.pop %v1875
    %v1888 = vmul.f32 1.0, %v1887
    %v1889 = vrcp.pop %v1876
    %v1890 = vmul.f32 1.0, %v1889
    %v1891 = vpack.c.bf16 %v1878, %v1878
    %v1892 = vpack.c.bf16 %v1880, %v1880
    %v1893 = vpack.c.bf16 %v1882, %v1882
    %v1894 = vpack.c.bf16 %v1884, %v1884
    %v1895 = vpack.c.bf16 %v1886, %v1886
    %v1896 = vpack.c.bf16 %v1888, %v1888
    %v1897 = vpack.c.bf16 %v1890, %v1890
    %v1905 = vunpack.c.l.b16 %v1891
    %v1906 = vunpack.c.l.b16 %v1892
    %v1907 = vunpack.c.l.b16 %v1893
    %v1908 = vunpack.c.l.b16 %v1894
    %v1909 = vunpack.c.l.b16 %v1895
    %v1910 = vunpack.c.l.b16 %v1896
    %v1911 = vunpack.c.l.b16 %v1897
    %v1912 = vpack.c.b16 %v1906, %v1905
    %v1913 = vpack.c.b16 %v1908, %v1907
    %v1914 = vpack.c.b16 %v1910, %v1909
    %v1915 = vpack.c.b16 %v1911, %v1911
    %1920 = vst [vmem:[#allocation2] sm:$0xff] %v1912
    %1921 = vst [vmem:[#allocation2 + $0x8] sm:$0xff] %v1913
    %1922 = vst [vmem:[#allocation2 + $0x10] sm:$0xff] %v1914
    %vm1923 = vcmask 125952
    %1924 = vst.msk [vmem:[#allocation2 + $0x18] sm:$0xf] %vm1923, %v1915
    // Predicated region
    $region42: #{autoencoder_forward.1} parent=1 // pred_check
      _
    $region43: #{autoencoder_forward.1} parent=1 // pred_check_branch
      %1926 = sbr.rel (0) target = $region45
    $region44: #{autoencoder_forward.1} parent=1 // pred_region
      _
    $region45: #{autoencoder_forward.1} parent=1 // pred_fallthru
      _
    // Predicated region
    $region46: #{autoencoder_forward.1} parent=1 // pred_check
      _
    $region47: #{autoencoder_forward.1} parent=1 // pred_check_branch
      %1928 = sbr.rel (0) target = $region49
    $region48: #{autoencoder_forward.1} parent=1 // pred_region
      %s1930 = ssub.s32 448, 448
      %1931 = vsyncadd [#allocation3], %s1930
      %s1933 = sshll.u32 [#allocation2], 4
      %s1934 = int_to_ptr.vmem [resolvable:$true] %s1933
      %1936 = dma.vmem_to_hbm [thread:$0]  %s1934, 448, %s11, [#allocation3]
    $region49: #{autoencoder_forward.1} parent=1 // pred_fallthru
      _
    // Predicated region
    $region50: #{autoencoder_forward.1} parent=1 // pred_check
      _
    $region51: #{autoencoder_forward.1} parent=1 // pred_check_branch
      %1938 = sbr.rel (0) target = $region53
    $region52: #{autoencoder_forward.1} parent=1 // pred_region
      _
    $region53: #{autoencoder_forward.1} parent=1 // pred_fallthru
      _
    // Predicated region
    $region54: #{autoencoder_forward.1} parent=1 // pred_check
      _
    $region55: #{autoencoder_forward.1} parent=1 // pred_check_branch
      %1940 = sbr.rel (0) target = $region57
    $region56: #{autoencoder_forward.1} parent=1 // pred_region
      %1941 = dma.done [#allocation3], 448
    $region57: #{autoencoder_forward.1} parent=1 // pred_fallthru
      _
    %1942 = vsyncpa [#allocation3], 1

</llo_original>
